<compile_context>
chip_gen: v5e
topology: v5e:2x2
jax: 0.10.0
libtpu: 0.0.40
codegen_flags: <defaults>
</compile_context>

<pallas_src>
import functools
import math

import jax
import jax.numpy as jnp
import numpy as np
from jax.experimental import pallas as pl
from jax.experimental.pallas import tpu as pltpu


def _round_up(x, m):
    return ((x + m - 1) // m) * m


def _layer_norm(z, gamma, beta, eps):
    mu = jnp.mean(z, axis=-1, keepdims=True)
    var = jnp.mean((z - mu) ** 2, axis=-1, keepdims=True)
    return (z - mu) * jax.lax.rsqrt(var + eps) * gamma + beta


# A @ B.T via dot_general (no in-kernel transpose).
_NT_DIMS = (((1,), (1,)), ((), ()))
_NEG_INF = -1e30


def encoder_layer_kernel(x_ref,
                         wq_ref, bq_ref, wk_ref, bk_ref, wv_ref, bv_ref,
                         wo_ref, bo_ref, w1_ref, b1_ref, w2_ref, b2_ref,
                         g1_ref, be1_ref, g2_ref, be2_ref,
                         *refs, nhead, hd, seq_len, eps, need_weights, compute_dtype):
    if need_weights:
        out_ref, attn_ref = refs[0], refs[1]
        k_scr, v_scr, ctx_scr, psum_scr = refs[2], refs[3], refs[4], refs[5]
    else:
        out_ref, attn_ref = refs[0], None
        k_scr, v_scr, ctx_scr = refs[1], refs[2], refs[3]
        psum_scr = None

    f32 = jnp.float32
    q_idx = pl.program_id(1)
    tq = out_ref.shape[1]          # query-tile rows
    Lp = k_scr.shape[1]            # padded sequence length

    # ---- K/V projections: computed once per batch element (first q tile),
    # stored head-major in VMEM scratch, reused by every subsequent q tile.
    @pl.when(q_idx == 0)
    def _():
        x_full = x_ref[0].astype(compute_dtype)                       # (Lp, E)
        k_full = jnp.dot(x_full, wk_ref[...], preferred_element_type=f32) + bk_ref[...]
        v_full = jnp.dot(x_full, wv_ref[...], preferred_element_type=f32) + bv_ref[...]
        k_full = k_full.astype(compute_dtype)
        v_full = v_full.astype(compute_dtype)
        for h in range(nhead):
            k_scr[h] = k_full[:, h * hd:(h + 1) * hd]
            v_scr[h] = v_full[:, h * hd:(h + 1) * hd]

    # ---- Query tile (also residual rows), sliced from the resident full block.
    start = pl.multiple_of(q_idx * tq, tq)
    x_tile = x_ref[0, pl.ds(start, tq), :]                             # (tq, E)
    x_res = x_tile.astype(f32)

    # Fused E-wide Q projection (1/sqrt(hd) folded into Wq / bq).
    q_full = jnp.dot(x_tile.astype(compute_dtype), wq_ref[...],
                     preferred_element_type=f32) + bq_ref[...]
    q_full = q_full.astype(compute_dtype)

    mask_keys = Lp > seq_len
    if mask_keys:
        key_valid = jax.lax.broadcasted_iota(jnp.int32, (tq, Lp), 1) < seq_len

    if need_weights:
        psum_scr[...] = jnp.zeros_like(psum_scr)

    # ---- Per-head attention: only QK^T / PV are head-width matmuls.
    for h in range(nhead):
        qh = q_full[:, h * hd:(h + 1) * hd]                            # (tq, hd)
        kh = k_scr[h]                                                  # (Lp, hd)
        vh = v_scr[h]                                                  # (Lp, hd)

        s = jax.lax.dot_general(qh, kh, _NT_DIMS, preferred_element_type=f32)   # (tq, Lp)
        if mask_keys:
            s = jnp.where(key_valid, s, _NEG_INF)
        s = s - jnp.max(s, axis=-1, keepdims=True)
        p = jnp.exp(s)
        denom = jnp.sum(p, axis=-1, keepdims=True)
        inv = pl.reciprocal(denom, approx=True)        # EUP slot
        inv = inv * (2.0 - denom * inv)                # one Newton step -> f32 accuracy
        p = p * inv
        if need_weights:
            psum_scr[...] += p

        oh = jnp.dot(p.astype(compute_dtype), vh, preferred_element_type=f32)   # (tq, hd)
        ctx_scr[:, h * hd:(h + 1) * hd] = oh.astype(compute_dtype)

    # ---- Fused E-wide output projection, residual + post-norm, FFN, post-norm.
    attn_out = jnp.dot(ctx_scr[...], wo_ref[...], preferred_element_type=f32) + bo_ref[...]

    y = _layer_norm(x_res + attn_out, g1_ref[...], be1_ref[...], eps)

    yc = y.astype(compute_dtype)
    h1 = jnp.maximum(jnp.dot(yc, w1_ref[...], preferred_element_type=f32) + b1_ref[...], 0.0)
    f = jnp.dot(h1.astype(compute_dtype), w2_ref[...], preferred_element_type=f32) + b2_ref[...]

    out = _layer_norm(y + f, g2_ref[...], be2_ref[...], eps)

    out_ref[0] = out.astype(out_ref.dtype)
    if need_weights:
        attn_ref[0] = (psum_scr[...] * (1.0 / nhead)).astype(attn_ref.dtype)


def _prepare_params(params, *, nhead, compute_dtype):
    """One-time wrapper-side re-layout: transpose, scale fold, f32 biases/LN params."""
    f32 = jnp.float32
    E = params["wo"].shape[0]
    hd = E // nhead
    scale = 1.0 / math.sqrt(hd)

    wqkv = params["wqkv"].astype(f32)          # (3E, E) torch (out, in) layout
    bqkv = params["bqkv"].astype(f32)          # (3E,)
    wq, wk, wv = wqkv[:E], wqkv[E:2 * E], wqkv[2 * E:]
    bq, bk, bv = bqkv[:E], bqkv[E:2 * E], bqkv[2 * E:]

    t = lambda w: jnp.transpose(w, (1, 0))

    return dict(
        wq=(t(wq) * scale).astype(compute_dtype),       # (E, E), scale folded
        bq=(bq * scale).reshape(1, E),
        wk=t(wk).astype(compute_dtype),
        bk=bk.reshape(1, E),
        wv=t(wv).astype(compute_dtype),
        bv=bv.reshape(1, E),
        wo=t(params["wo"].astype(f32)).astype(compute_dtype),
        bo=params["bo"].astype(f32).reshape(1, E),
        w1=t(params["w1"].astype(f32)).astype(compute_dtype),   # (E, d_ffn)
        b1=params["b1"].astype(f32).reshape(1, -1),
        w2=t(params["w2"].astype(f32)).astype(compute_dtype),   # (d_ffn, E)
        b2=params["b2"].astype(f32).reshape(1, E),
        g1=params["g1"].astype(f32).reshape(1, E),
        be1=params["be1"].astype(f32).reshape(1, E),
        g2=params["g2"].astype(f32).reshape(1, E),
        be2=params["be2"].astype(f32).reshape(1, E),
    )


def transformer_encoder_layer(src, params, *, nhead, eps=1e-6, need_weights=True,
                              compute_dtype=None, out_dtype=None, q_block=128,
                              vmem_limit_bytes=48 * 1024 * 1024):
    """sepformer TransformerEncoderLayer forward (normalize_before=False, dropout=0)."""
    B, L, E = src.shape
    if E % nhead != 0:
        raise ValueError("d_model must be divisible by nhead")
    hd = E // nhead
    d_ffn = params["w1"].shape[0]
    if compute_dtype is None:
        # bf16 MXU operands by default (f32 stats); pass jnp.float32 for 1e-4 parity.
        compute_dtype = jnp.bfloat16 if src.dtype == jnp.float32 else src.dtype
    out_dtype = src.dtype if out_dtype is None else out_dtype

    # Query tiling with a masked/padded tail tile (no tq = L fallback).
    tq = min(q_block, _round_up(L, 8))
    Lp = _round_up(L, tq)
    nq = Lp // tq

    x = src
    if Lp != L:
        x = jnp.pad(src, ((0, 0), (0, Lp - L), (0, 0)))

    p = _prepare_params(params, nhead=nhead, compute_dtype=compute_dtype)

    full = lambda shape: pl.BlockSpec(shape, lambda b, q: (0,) * len(shape))

    in_specs = [
        pl.BlockSpec((1, Lp, E), lambda b, q: (b, 0, 0)),   # src: constant across q -> no re-DMA
        full((E, E)), full((1, E)),        # Wq (scale folded), bq
        full((E, E)), full((1, E)),        # Wk, bk
        full((E, E)), full((1, E)),        # Wv, bv
        full((E, E)), full((1, E)),        # Wo, bo
        full((E, d_ffn)), full((1, d_ffn)),   # FFN W1, b1
        full((d_ffn, E)), full((1, E)),       # FFN W2, b2
        full((1, E)), full((1, E)),           # norm1 gamma / beta
        full((1, E)), full((1, E)),           # norm2 gamma / beta
    ]

    out_block = pl.BlockSpec((1, tq, E), lambda b, q: (b, q, 0))
    if need_weights:
        out_shape = (jax.ShapeDtypeStruct((B, Lp, E), out_dtype),
                     jax.ShapeDtypeStruct((B, Lp, Lp), jnp.float32))
        out_specs = [out_block, pl.BlockSpec((1, tq, Lp), lambda b, q: (b, q, 0))]
    else:
        out_shape = jax.ShapeDtypeStruct((B, Lp, E), out_dtype)
        out_specs = out_block

    scratch_shapes = [
        pltpu.VMEM((nhead, Lp, hd), compute_dtype),   # K, head-major (written once per batch)
        pltpu.VMEM((nhead, Lp, hd), compute_dtype),   # V, head-major
        pltpu.VMEM((tq, E), compute_dtype),           # per-head context assembly
    ]
    if need_weights:
        scratch_shapes.append(pltpu.VMEM((tq, Lp), jnp.float32))   # head-summed attn weights

    kernel = functools.partial(
        encoder_layer_kernel, nhead=nhead, hd=hd, seq_len=L, eps=eps,
        need_weights=need_weights, compute_dtype=compute_dtype)

    call = pl.pallas_call(
        kernel,
        out_shape=out_shape,
        grid_spec=pltpu.PrefetchScalarGridSpec(
            num_scalar_prefetch=0,
            grid=(B, nq),
            in_specs=in_specs,
            out_specs=out_specs,
            scratch_shapes=scratch_shapes,
        ),
        compiler_params=pltpu.CompilerParams(
            # q axis "arbitrary": K/V scratch written at q==0 is reused by later q tiles.
            dimension_semantics=("parallel", "arbitrary"),
            vmem_limit_bytes=vmem_limit_bytes,
        ),
    )

    res = call(x,
               p["wq"], p["bq"], p["wk"], p["bk"], p["wv"], p["bv"],
               p["wo"], p["bo"], p["w1"], p["b1"], p["w2"], p["b2"],
               p["g1"], p["be1"], p["g2"], p["be2"])

    if need_weights:
        out, attn = res
        if Lp != L:
            out = out[:, :L]
            attn = attn[:, :L, :L]
        return out, attn
    out = res
    if Lp != L:
        out = out[:, :L]
    return out


def reference_jax(src, params, *, nhead, eps=1e-6):
    """Pure-JAX reference mirroring torch.nn semantics (dropout=0, post-norm)."""
    B, L, E = src.shape
    hd = E // nhead
    x = src.astype(jnp.float32)
    qkv = jnp.einsum("ble,fe->blf", x, params["wqkv"]) + params["bqkv"]
    q, k, v = jnp.split(qkv, 3, axis=-1)
    q = q.reshape(B, L, nhead, hd).transpose(0, 2, 1, 3) / np.sqrt(hd)
    k = k.reshape(B, L, nhead, hd).transpose(0, 2, 1, 3)
    v = v.reshape(B, L, nhead, hd).transpose(0, 2, 1, 3)
    s = jnp.einsum("bhld,bhsd->bhls", q, k)
    p = jax.nn.softmax(s, axis=-1)
    ao = jnp.einsum("bhls,bhsd->bhld", p, v).transpose(0, 2, 1, 3).reshape(B, L, E)
    attn_out = jnp.einsum("ble,fe->blf", ao, params["wo"]) + params["bo"]

    def ln(z, g, b):
        mu = jnp.mean(z, -1, keepdims=True)
        var = jnp.mean((z - mu) ** 2, -1, keepdims=True)
        return (z - mu) / jnp.sqrt(var + eps) * g + b

    y = ln(x + attn_out, params["g1"], params["be1"])
    h1 = jax.nn.relu(jnp.einsum("ble,fe->blf", y, params["w1"]) + params["b1"])
    f = jnp.einsum("blf,ef->ble", h1, params["w2"]) + params["b2"]
    out = ln(y + f, params["g2"], params["be2"])
    return out, p.mean(axis=1)


def _make_params(key, E, d_ffn):
    keys = jax.random.split(key, 12)
    scale = 0.1
    return {
        "wqkv": scale * jax.random.normal(keys[0], (3 * E, E), jnp.float32),
        "bqkv": scale * jax.random.normal(keys[1], (3 * E,), jnp.float32),
        "wo":   scale * jax.random.normal(keys[2], (E, E), jnp.float32),
        "bo":   scale * jax.random.normal(keys[3], (E,), jnp.float32),
        "w1":   scale * jax.random.normal(keys[4], (d_ffn, E), jnp.float32),
        "b1":   scale * jax.random.normal(keys[5], (d_ffn,), jnp.float32),
        "w2":   scale * jax.random.normal(keys[6], (E, d_ffn), jnp.float32),
        "b2":   scale * jax.random.normal(keys[7], (E,), jnp.float32),
        "g1":   1.0 + scale * jax.random.normal(keys[8], (E,), jnp.float32),
        "be1":  scale * jax.random.normal(keys[9], (E,), jnp.float32),
        "g2":   1.0 + scale * jax.random.normal(keys[10], (E,), jnp.float32),
        "be2":  scale * jax.random.normal(keys[11], (E,), jnp.float32),
    }


if __name__ == "__main__":
    E, nhead, d_ffn = 32, 4, 64
    params = _make_params(jax.random.PRNGKey(0), E, d_ffn)

    # ---- 1) Parity path: f32 compute, attention weights returned (torch semantics).
    B, L = 2, 8
    src = jax.random.normal(jax.random.PRNGKey(42), (B, L, E), jnp.float32)
    out, attn = transformer_encoder_layer(src, params, nhead=nhead,
                                          compute_dtype=jnp.float32)
    jax.block_until_ready(out)
    jax.block_until_ready(attn)
    ref_out, ref_attn = reference_jax(src, params, nhead=nhead)
    np.testing.assert_allclose(np.asarray(out), np.asarray(ref_out), rtol=1e-4, atol=1e-4)
    np.testing.assert_allclose(np.asarray(attn), np.asarray(ref_attn), rtol=1e-4, atol=1e-4)

    # ---- 2) Ragged sequence: multiple query tiles + masked/padded tail tile,
    # exercises the once-per-batch K/V scratch reuse across q tiles.
    L2 = 12
    src2 = jax.random.normal(jax.random.PRNGKey(7), (B, L2, E), jnp.float32)
    out2, attn2 = transformer_encoder_layer(src2, params, nhead=nhead,
                                            compute_dtype=jnp.float32, q_block=8)
    jax.block_until_ready(out2)
    jax.block_until_ready(attn2)
    ref_out2, ref_attn2 = reference_jax(src2, params, nhead=nhead)
    np.testing.assert_allclose(np.asarray(out2), np.asarray(ref_out2), rtol=1e-4, atol=1e-4)
    np.testing.assert_allclose(np.asarray(attn2), np.asarray(ref_attn2), rtol=1e-4, atol=1e-4)

    # ---- 3) Fast default path: bf16 MXU operands (f32 stats), no attention weights.
    out_fast = transformer_encoder_layer(src, params, nhead=nhead, need_weights=False)
    jax.block_until_ready(out_fast)
    np.testing.assert_allclose(np.asarray(out_fast), np.asarray(ref_out), rtol=7e-2, atol=7e-2)

    print("KERNEL_OK")
</pallas_src>

<mosaic_0001>
module attributes {stable_mosaic.version = 11 : i64} {
  func.func @encoder_layer_kernel(%arg0: i32, %arg1: i32, %arg2: memref<1x8x32xf32, #tpu.memory_space<vmem>>, %arg3: memref<32x32xf32, #tpu.memory_space<vmem>>, %arg4: memref<1x32xf32, #tpu.memory_space<vmem>>, %arg5: memref<32x32xf32, #tpu.memory_space<vmem>>, %arg6: memref<1x32xf32, #tpu.memory_space<vmem>>, %arg7: memref<32x32xf32, #tpu.memory_space<vmem>>, %arg8: memref<1x32xf32, #tpu.memory_space<vmem>>, %arg9: memref<32x32xf32, #tpu.memory_space<vmem>>, %arg10: memref<1x32xf32, #tpu.memory_space<vmem>>, %arg11: memref<32x64xf32, #tpu.memory_space<vmem>>, %arg12: memref<1x64xf32, #tpu.memory_space<vmem>>, %arg13: memref<64x32xf32, #tpu.memory_space<vmem>>, %arg14: memref<1x32xf32, #tpu.memory_space<vmem>>, %arg15: memref<1x32xf32, #tpu.memory_space<vmem>>, %arg16: memref<1x32xf32, #tpu.memory_space<vmem>>, %arg17: memref<1x32xf32, #tpu.memory_space<vmem>>, %arg18: memref<1x32xf32, #tpu.memory_space<vmem>>, %arg19: memref<1x8x32xf32, #tpu.memory_space<vmem>>, %arg20: memref<1x8x8xf32, #tpu.memory_space<vmem>>, %arg21: memref<4x8x8xf32, #tpu.memory_space<vmem>>, %arg22: memref<4x8x8xf32, #tpu.memory_space<vmem>>, %arg23: memref<8x32xf32, #tpu.memory_space<vmem>>, %arg24: memref<8x8xf32, #tpu.memory_space<vmem>>) attributes {dimension_semantics = [#tpu.dimension_semantics<parallel>, #tpu.dimension_semantics<arbitrary>], iteration_bounds = array<i64: 2, 1>, scalar_prefetch = 0 : i64, scratch_operands = 4 : i64, tpu.core_type = #tpu.core_type<tc>, window_params = [{transform_indices = @transform_0, window_bounds = array<i64: 1, 8, 32>}, {pipeline_mode = #tpu.pipeline_mode<synchronous>, transform_indices = @transform_1, window_bounds = array<i64: 32, 32>}, {pipeline_mode = #tpu.pipeline_mode<synchronous>, transform_indices = @transform_2, window_bounds = array<i64: 1, 32>}, {pipeline_mode = #tpu.pipeline_mode<synchronous>, transform_indices = @transform_3, window_bounds = array<i64: 32, 32>}, {pipeline_mode = #tpu.pipeline_mode<synchronous>, transform_indices = @transform_4, window_bounds = array<i64: 1, 32>}, {pipeline_mode = #tpu.pipeline_mode<synchronous>, transform_indices = @transform_5, window_bounds = array<i64: 32, 32>}, {pipeline_mode = #tpu.pipeline_mode<synchronous>, transform_indices = @transform_6, window_bounds = array<i64: 1, 32>}, {pipeline_mode = #tpu.pipeline_mode<synchronous>, transform_indices = @transform_7, window_bounds = array<i64: 32, 32>}, {pipeline_mode = #tpu.pipeline_mode<synchronous>, transform_indices = @transform_8, window_bounds = array<i64: 1, 32>}, {pipeline_mode = #tpu.pipeline_mode<synchronous>, transform_indices = @transform_9, window_bounds = array<i64: 32, 64>}, {pipeline_mode = #tpu.pipeline_mode<synchronous>, transform_indices = @transform_10, window_bounds = array<i64: 1, 64>}, {pipeline_mode = #tpu.pipeline_mode<synchronous>, transform_indices = @transform_11, window_bounds = array<i64: 64, 32>}, {pipeline_mode = #tpu.pipeline_mode<synchronous>, transform_indices = @transform_12, window_bounds = array<i64: 1, 32>}, {pipeline_mode = #tpu.pipeline_mode<synchronous>, transform_indices = @transform_13, window_bounds = array<i64: 1, 32>}, {pipeline_mode = #tpu.pipeline_mode<synchronous>, transform_indices = @transform_14, window_bounds = array<i64: 1, 32>}, {pipeline_mode = #tpu.pipeline_mode<synchronous>, transform_indices = @transform_15, window_bounds = array<i64: 1, 32>}, {pipeline_mode = #tpu.pipeline_mode<synchronous>, transform_indices = @transform_16, window_bounds = array<i64: 1, 32>}, {transform_indices = @transform_17, window_bounds = array<i64: 1, 8, 32>}, {transform_indices = @transform_18, window_bounds = array<i64: 1, 8, 8>}]} {
    %c0_i32 = arith.constant 0 : i32
    %0 = arith.cmpi eq, %arg1, %c0_i32 : i32
    %1 = arith.extui %0 : i1 to i32
    %c0_i32_0 = arith.constant 0 : i32
    %2 = arith.cmpi ne, %1, %c0_i32_0 : i32
    scf.if %2 {
      %c0_116 = arith.constant 0 : index
      %c0_117 = arith.constant 0 : index
      %c0_118 = arith.constant 0 : index
      %192 = vector.load %arg2[%c0_116, %c0_117, %c0_118] : memref<1x8x32xf32, #tpu.memory_space<vmem>>, vector<1x8x32xf32>
      %193 = vector.shape_cast %192 : vector<1x8x32xf32> to vector<8x32xf32>
      %c0_119 = arith.constant 0 : index
      %c0_120 = arith.constant 0 : index
      %194 = vector.load %arg5[%c0_119, %c0_120] : memref<32x32xf32, #tpu.memory_space<vmem>>, vector<32x32xf32>
      %cst_121 = arith.constant dense<0.000000e+00> : vector<8x32xf32>
      %195 = tpu.matmul %193, %194, %cst_121 {dimension_numbers = #tpu.dot_dimension_numbers<[1], [0], [0], [1], [0, 0, 1, 1], [], []>} : vector<8x32xf32>, vector<32x32xf32>, vector<8x32xf32> -> vector<8x32xf32>
      %c0_122 = arith.constant 0 : index
      %c0_123 = arith.constant 0 : index
      %196 = vector.load %arg6[%c0_122, %c0_123] : memref<1x32xf32, #tpu.memory_space<vmem>>, vector<1x32xf32>
      %197 = vector.broadcast %196 : vector<1x32xf32> to vector<8x32xf32>
      %198 = arith.addf %195, %197 : vector<8x32xf32>
      %c0_124 = arith.constant 0 : index
      %c0_125 = arith.constant 0 : index
      %199 = vector.load %arg7[%c0_124, %c0_125] : memref<32x32xf32, #tpu.memory_space<vmem>>, vector<32x32xf32>
      %cst_126 = arith.constant dense<0.000000e+00> : vector<8x32xf32>
      %200 = tpu.matmul %193, %199, %cst_126 {dimension_numbers = #tpu.dot_dimension_numbers<[1], [0], [0], [1], [0, 0, 1, 1], [], []>} : vector<8x32xf32>, vector<32x32xf32>, vector<8x32xf32> -> vector<8x32xf32>
      %c0_127 = arith.constant 0 : index
      %c0_128 = arith.constant 0 : index
      %201 = vector.load %arg8[%c0_127, %c0_128] : memref<1x32xf32, #tpu.memory_space<vmem>>, vector<1x32xf32>
      %202 = vector.broadcast %201 : vector<1x32xf32> to vector<8x32xf32>
      %203 = arith.addf %200, %202 : vector<8x32xf32>
      %204 = vector.extract_strided_slice %198 {offsets = [0, 0], sizes = [8, 8], strides = [1, 1]} : vector<8x32xf32> to vector<8x8xf32>
      %c0_129 = arith.constant 0 : index
      %c0_130 = arith.constant 0 : index
      %c0_131 = arith.constant 0 : index
      %205 = vector.load %arg21[%c0_129, %c0_130, %c0_131] : memref<4x8x8xf32, #tpu.memory_space<vmem>>, vector<1x8x8xf32>
      %206 = vector.shape_cast %205 : vector<1x8x8xf32> to vector<8x8xf32>
      %207 = vector.shape_cast %204 : vector<8x8xf32> to vector<1x8x8xf32>
      tpu.vector_store %arg21[%c0_129, %c0_130, %c0_131], %207 {strides = array<i32>} : memref<4x8x8xf32, #tpu.memory_space<vmem>>, vector<1x8x8xf32>,
      %208 = vector.extract_strided_slice %203 {offsets = [0, 0], sizes = [8, 8], strides = [1, 1]} : vector<8x32xf32> to vector<8x8xf32>
      %c0_132 = arith.constant 0 : index
      %c0_133 = arith.constant 0 : index
      %c0_134 = arith.constant 0 : index
      %209 = vector.load %arg22[%c0_132, %c0_133, %c0_134] : memref<4x8x8xf32, #tpu.memory_space<vmem>>, vector<1x8x8xf32>
      %210 = vector.shape_cast %209 : vector<1x8x8xf32> to vector<8x8xf32>
      %211 = vector.shape_cast %208 : vector<8x8xf32> to vector<1x8x8xf32>
      tpu.vector_store %arg22[%c0_132, %c0_133, %c0_134], %211 {strides = array<i32>} : memref<4x8x8xf32, #tpu.memory_space<vmem>>, vector<1x8x8xf32>,
      %212 = vector.extract_strided_slice %198 {offsets = [0, 8], sizes = [8, 8], strides = [1, 1]} : vector<8x32xf32> to vector<8x8xf32>
      %c1_135 = arith.constant 1 : index
      %c0_136 = arith.constant 0 : index
      %c0_137 = arith.constant 0 : index
      %213 = vector.load %arg21[%c1_135, %c0_136, %c0_137] : memref<4x8x8xf32, #tpu.memory_space<vmem>>, vector<1x8x8xf32>
      %214 = vector.shape_cast %213 : vector<1x8x8xf32> to vector<8x8xf32>
      %215 = vector.shape_cast %212 : vector<8x8xf32> to vector<1x8x8xf32>
      tpu.vector_store %arg21[%c1_135, %c0_136, %c0_137], %215 {strides = array<i32>} : memref<4x8x8xf32, #tpu.memory_space<vmem>>, vector<1x8x8xf32>,
      %216 = vector.extract_strided_slice %203 {offsets = [0, 8], sizes = [8, 8], strides = [1, 1]} : vector<8x32xf32> to vector<8x8xf32>
      %c1_138 = arith.constant 1 : index
      %c0_139 = arith.constant 0 : index
      %c0_140 = arith.constant 0 : index
      %217 = vector.load %arg22[%c1_138, %c0_139, %c0_140] : memref<4x8x8xf32, #tpu.memory_space<vmem>>, vector<1x8x8xf32>
      %218 = vector.shape_cast %217 : vector<1x8x8xf32> to vector<8x8xf32>
      %219 = vector.shape_cast %216 : vector<8x8xf32> to vector<1x8x8xf32>
      tpu.vector_store %arg22[%c1_138, %c0_139, %c0_140], %219 {strides = array<i32>} : memref<4x8x8xf32, #tpu.memory_space<vmem>>, vector<1x8x8xf32>,
      %220 = vector.extract_strided_slice %198 {offsets = [0, 16], sizes = [8, 8], strides = [1, 1]} : vector<8x32xf32> to vector<8x8xf32>
      %c2_141 = arith.constant 2 : index
      %c0_142 = arith.constant 0 : index
      %c0_143 = arith.constant 0 : index
      %221 = vector.load %arg21[%c2_141, %c0_142, %c0_143] : memref<4x8x8xf32, #tpu.memory_space<vmem>>, vector<1x8x8xf32>
      %222 = vector.shape_cast %221 : vector<1x8x8xf32> to vector<8x8xf32>
      %223 = vector.shape_cast %220 : vector<8x8xf32> to vector<1x8x8xf32>
      tpu.vector_store %arg21[%c2_141, %c0_142, %c0_143], %223 {strides = array<i32>} : memref<4x8x8xf32, #tpu.memory_space<vmem>>, vector<1x8x8xf32>,
      %224 = vector.extract_strided_slice %203 {offsets = [0, 16], sizes = [8, 8], strides = [1, 1]} : vector<8x32xf32> to vector<8x8xf32>
      %c2_144 = arith.constant 2 : index
      %c0_145 = arith.constant 0 : index
      %c0_146 = arith.constant 0 : index
      %225 = vector.load %arg22[%c2_144, %c0_145, %c0_146] : memref<4x8x8xf32, #tpu.memory_space<vmem>>, vector<1x8x8xf32>
      %226 = vector.shape_cast %225 : vector<1x8x8xf32> to vector<8x8xf32>
      %227 = vector.shape_cast %224 : vector<8x8xf32> to vector<1x8x8xf32>
      tpu.vector_store %arg22[%c2_144, %c0_145, %c0_146], %227 {strides = array<i32>} : memref<4x8x8xf32, #tpu.memory_space<vmem>>, vector<1x8x8xf32>,
      %228 = vector.extract_strided_slice %198 {offsets = [0, 24], sizes = [8, 8], strides = [1, 1]} : vector<8x32xf32> to vector<8x8xf32>
      %c3_147 = arith.constant 3 : index
      %c0_148 = arith.constant 0 : index
      %c0_149 = arith.constant 0 : index
      %229 = vector.load %arg21[%c3_147, %c0_148, %c0_149] : memref<4x8x8xf32, #tpu.memory_space<vmem>>, vector<1x8x8xf32>
      %230 = vector.shape_cast %229 : vector<1x8x8xf32> to vector<8x8xf32>
      %231 = vector.shape_cast %228 : vector<8x8xf32> to vector<1x8x8xf32>
      tpu.vector_store %arg21[%c3_147, %c0_148, %c0_149], %231 {strides = array<i32>} : memref<4x8x8xf32, #tpu.memory_space<vmem>>, vector<1x8x8xf32>,
      %232 = vector.extract_strided_slice %203 {offsets = [0, 24], sizes = [8, 8], strides = [1, 1]} : vector<8x32xf32> to vector<8x8xf32>
      %c3_150 = arith.constant 3 : index
      %c0_151 = arith.constant 0 : index
      %c0_152 = arith.constant 0 : index
      %233 = vector.load %arg22[%c3_150, %c0_151, %c0_152] : memref<4x8x8xf32, #tpu.memory_space<vmem>>, vector<1x8x8xf32>
      %234 = vector.shape_cast %233 : vector<1x8x8xf32> to vector<8x8xf32>
      %235 = vector.shape_cast %232 : vector<8x8xf32> to vector<1x8x8xf32>
      tpu.vector_store %arg22[%c3_150, %c0_151, %c0_152], %235 {strides = array<i32>} : memref<4x8x8xf32, #tpu.memory_space<vmem>>, vector<1x8x8xf32>,
    } else {
    }
    %c8_i32 = arith.constant 8 : i32
    %3 = arith.muli %arg1, %c8_i32 : i32
    %4 = tpu.assume_multiple %3, 8 : i32
    %c0 = arith.constant 0 : index
    %5 = arith.index_cast %4 : i32 to index
    %c0_1 = arith.constant 0 : index
    %6 = vector.load %arg2[%c0, %5, %c0_1] : memref<1x8x32xf32, #tpu.memory_space<vmem>>, vector<1x8x32xf32>
    %7 = vector.shape_cast %6 : vector<1x8x32xf32> to vector<8x32xf32>
    %c0_2 = arith.constant 0 : index
    %c0_3 = arith.constant 0 : index
    %8 = vector.load %arg3[%c0_2, %c0_3] : memref<32x32xf32, #tpu.memory_space<vmem>>, vector<32x32xf32>
    %cst = arith.constant dense<0.000000e+00> : vector<8x32xf32>
    %9 = tpu.matmul %7, %8, %cst {dimension_numbers = #tpu.dot_dimension_numbers<[1], [0], [0], [1], [0, 0, 1, 1], [], []>} : vector<8x32xf32>, vector<32x32xf32>, vector<8x32xf32> -> vector<8x32xf32>
    %c0_4 = arith.constant 0 : index
    %c0_5 = arith.constant 0 : index
    %10 = vector.load %arg4[%c0_4, %c0_5] : memref<1x32xf32, #tpu.memory_space<vmem>>, vector<1x32xf32>
    %11 = vector.broadcast %10 : vector<1x32xf32> to vector<8x32xf32>
    %12 = arith.addf %9, %11 : vector<8x32xf32>
    %cst_6 = arith.constant 0.000000e+00 : f32
    %13 = vector.broadcast %cst_6 : f32 to vector<8x8xf32>
    %c0_7 = arith.constant 0 : index
    %c0_8 = arith.constant 0 : index
    %14 = vector.load %arg24[%c0_7, %c0_8] : memref<8x8xf32, #tpu.memory_space<vmem>>, vector<8x8xf32>
    tpu.vector_store %arg24[%c0_7, %c0_8], %13 {strides = array<i32>} : memref<8x8xf32, #tpu.memory_space<vmem>>, vector<8x8xf32>,
    %15 = vector.extract_strided_slice %12 {offsets = [0, 0], sizes = [8, 8], strides = [1, 1]} : vector<8x32xf32> to vector<8x8xf32>
    %c0_9 = arith.constant 0 : index
    %c0_10 = arith.constant 0 : index
    %c0_11 = arith.constant 0 : index
    %16 = vector.load %arg21[%c0_9, %c0_10, %c0_11] : memref<4x8x8xf32, #tpu.memory_space<vmem>>, vector<1x8x8xf32>
    %17 = vector.shape_cast %16 : vector<1x8x8xf32> to vector<8x8xf32>
    %c0_12 = arith.constant 0 : index
    %c0_13 = arith.constant 0 : index
    %c0_14 = arith.constant 0 : index
    %18 = vector.load %arg22[%c0_12, %c0_13, %c0_14] : memref<4x8x8xf32, #tpu.memory_space<vmem>>, vector<1x8x8xf32>
    %19 = vector.shape_cast %18 : vector<1x8x8xf32> to vector<8x8xf32>
    %cst_15 = arith.constant dense<0.000000e+00> : vector<8x8xf32>
    %20 = tpu.matmul %15, %17, %cst_15 {dimension_numbers = #tpu.dot_dimension_numbers<[1], [1], [0], [0], [0, 0, 1, 0], [], []>} : vector<8x8xf32>, vector<8x8xf32>, vector<8x8xf32> -> vector<8x8xf32>
    %cst_16 = arith.constant dense<0xFF800000> : vector<8xf32>
    %21 = vector.multi_reduction <maximumf>, %20, %cst_16 [1] : vector<8x8xf32> to vector<8xf32>
    %22 = vector.shape_cast %21 : vector<8xf32> to vector<8x1xf32>
    %23 = vector.broadcast %22 : vector<8x1xf32> to vector<8x8xf32>
    %24 = arith.subf %20, %23 : vector<8x8xf32>
    %25 = math.exp %24 : vector<8x8xf32>
    %cst_17 = arith.constant dense<0.000000e+00> : vector<8xf32>
    %26 = vector.multi_reduction <add>, %25, %cst_17 [1] : vector<8x8xf32> to vector<8xf32>
    %27 = vector.shape_cast %26 : vector<8xf32> to vector<8x1xf32>
    %28 = tpu.reciprocal %27 {approx = true} : vector<8x1xf32> -> vector<8x1xf32>
    %29 = arith.mulf %27, %28 : vector<8x1xf32>
    %cst_18 = arith.constant 2.000000e+00 : f32
    %30 = vector.broadcast %cst_18 : f32 to vector<8x1xf32>
    %31 = arith.subf %30, %29 : vector<8x1xf32>
    %32 = arith.mulf %28, %31 : vector<8x1xf32>
    %33 = vector.broadcast %32 : vector<8x1xf32> to vector<8x8xf32>
    %34 = arith.mulf %25, %33 : vector<8x8xf32>
    %c0_19 = arith.constant 0 : index
    %c0_20 = arith.constant 0 : index
    %35 = vector.load %arg24[%c0_19, %c0_20] : memref<8x8xf32, #tpu.memory_space<vmem>>, vector<8x8xf32>
    %36 = arith.addf %35, %34 : vector<8x8xf32>
    %c0_21 = arith.constant 0 : index
    %c0_22 = arith.constant 0 : index
    %37 = vector.load %arg24[%c0_21, %c0_22] : memref<8x8xf32, #tpu.memory_space<vmem>>, vector<8x8xf32>
    tpu.vector_store %arg24[%c0_21, %c0_22], %36 {strides = array<i32>} : memref<8x8xf32, #tpu.memory_space<vmem>>, vector<8x8xf32>,
    %cst_23 = arith.constant dense<0.000000e+00> : vector<8x8xf32>
    %38 = tpu.matmul %34, %19, %cst_23 {dimension_numbers = #tpu.dot_dimension_numbers<[1], [0], [0], [1], [0, 0, 1, 1], [], []>} : vector<8x8xf32>, vector<8x8xf32>, vector<8x8xf32> -> vector<8x8xf32>
    %c0_24 = arith.constant 0 : index
    %c0_25 = arith.constant 0 : index
    %39 = vector.load %arg23[%c0_24, %c0_25] : memref<8x32xf32, #tpu.memory_space<vmem>>, vector<8x8xf32>
    tpu.vector_store %arg23[%c0_24, %c0_25], %38 {strides = array<i32>} : memref<8x32xf32, #tpu.memory_space<vmem>>, vector<8x8xf32>,
    %40 = vector.extract_strided_slice %12 {offsets = [0, 8], sizes = [8, 8], strides = [1, 1]} : vector<8x32xf32> to vector<8x8xf32>
    %c1 = arith.constant 1 : index
    %c0_26 = arith.constant 0 : index
    %c0_27 = arith.constant 0 : index
    %41 = vector.load %arg21[%c1, %c0_26, %c0_27] : memref<4x8x8xf32, #tpu.memory_space<vmem>>, vector<1x8x8xf32>
    %42 = vector.shape_cast %41 : vector<1x8x8xf32> to vector<8x8xf32>
    %c1_28 = arith.constant 1 : index
    %c0_29 = arith.constant 0 : index
    %c0_30 = arith.constant 0 : index
    %43 = vector.load %arg22[%c1_28, %c0_29, %c0_30] : memref<4x8x8xf32, #tpu.memory_space<vmem>>, vector<1x8x8xf32>
    %44 = vector.shape_cast %43 : vector<1x8x8xf32> to vector<8x8xf32>
    %cst_31 = arith.constant dense<0.000000e+00> : vector<8x8xf32>
    %45 = tpu.matmul %40, %42, %cst_31 {dimension_numbers = #tpu.dot_dimension_numbers<[1], [1], [0], [0], [0, 0, 1, 0], [], []>} : vector<8x8xf32>, vector<8x8xf32>, vector<8x8xf32> -> vector<8x8xf32>
    %cst_32 = arith.constant dense<0xFF800000> : vector<8xf32>
    %46 = vector.multi_reduction <maximumf>, %45, %cst_32 [1] : vector<8x8xf32> to vector<8xf32>
    %47 = vector.shape_cast %46 : vector<8xf32> to vector<8x1xf32>
    %48 = vector.broadcast %47 : vector<8x1xf32> to vector<8x8xf32>
    %49 = arith.subf %45, %48 : vector<8x8xf32>
    %50 = math.exp %49 : vector<8x8xf32>
    %cst_33 = arith.constant dense<0.000000e+00> : vector<8xf32>
    %51 = vector.multi_reduction <add>, %50, %cst_33 [1] : vector<8x8xf32> to vector<8xf32>
    %52 = vector.shape_cast %51 : vector<8xf32> to vector<8x1xf32>
    %53 = tpu.reciprocal %52 {approx = true} : vector<8x1xf32> -> vector<8x1xf32>
    %54 = arith.mulf %52, %53 : vector<8x1xf32>
    %cst_34 = arith.constant 2.000000e+00 : f32
    %55 = vector.broadcast %cst_34 : f32 to vector<8x1xf32>
    %56 = arith.subf %55, %54 : vector<8x1xf32>
    %57 = arith.mulf %53, %56 : vector<8x1xf32>
    %58 = vector.broadcast %57 : vector<8x1xf32> to vector<8x8xf32>
    %59 = arith.mulf %50, %58 : vector<8x8xf32>
    %c0_35 = arith.constant 0 : index
    %c0_36 = arith.constant 0 : index
    %60 = vector.load %arg24[%c0_35, %c0_36] : memref<8x8xf32, #tpu.memory_space<vmem>>, vector<8x8xf32>
    %61 = arith.addf %60, %59 : vector<8x8xf32>
    %c0_37 = arith.constant 0 : index
    %c0_38 = arith.constant 0 : index
    %62 = vector.load %arg24[%c0_37, %c0_38] : memref<8x8xf32, #tpu.memory_space<vmem>>, vector<8x8xf32>
    tpu.vector_store %arg24[%c0_37, %c0_38], %61 {strides = array<i32>} : memref<8x8xf32, #tpu.memory_space<vmem>>, vector<8x8xf32>,
    %cst_39 = arith.constant dense<0.000000e+00> : vector<8x8xf32>
    %63 = tpu.matmul %59, %44, %cst_39 {dimension_numbers = #tpu.dot_dimension_numbers<[1], [0], [0], [1], [0, 0, 1, 1], [], []>} : vector<8x8xf32>, vector<8x8xf32>, vector<8x8xf32> -> vector<8x8xf32>
    %c0_40 = arith.constant 0 : index
    %c8 = arith.constant 8 : index
    %64 = vector.load %arg23[%c0_40, %c8] : memref<8x32xf32, #tpu.memory_space<vmem>>, vector<8x8xf32>
    tpu.vector_store %arg23[%c0_40, %c8], %63 {strides = array<i32>} : memref<8x32xf32, #tpu.memory_space<vmem>>, vector<8x8xf32>,
    %65 = vector.extract_strided_slice %12 {offsets = [0, 16], sizes = [8, 8], strides = [1, 1]} : vector<8x32xf32> to vector<8x8xf32>
    %c2 = arith.constant 2 : index
    %c0_41 = arith.constant 0 : index
    %c0_42 = arith.constant 0 : index
    %66 = vector.load %arg21[%c2, %c0_41, %c0_42] : memref<4x8x8xf32, #tpu.memory_space<vmem>>, vector<1x8x8xf32>
    %67 = vector.shape_cast %66 : vector<1x8x8xf32> to vector<8x8xf32>
    %c2_43 = arith.constant 2 : index
    %c0_44 = arith.constant 0 : index
    %c0_45 = arith.constant 0 : index
    %68 = vector.load %arg22[%c2_43, %c0_44, %c0_45] : memref<4x8x8xf32, #tpu.memory_space<vmem>>, vector<1x8x8xf32>
    %69 = vector.shape_cast %68 : vector<1x8x8xf32> to vector<8x8xf32>
    %cst_46 = arith.constant dense<0.000000e+00> : vector<8x8xf32>
    %70 = tpu.matmul %65, %67, %cst_46 {dimension_numbers = #tpu.dot_dimension_numbers<[1], [1], [0], [0], [0, 0, 1, 0], [], []>} : vector<8x8xf32>, vector<8x8xf32>, vector<8x8xf32> -> vector<8x8xf32>
    %cst_47 = arith.constant dense<0xFF800000> : vector<8xf32>
    %71 = vector.multi_reduction <maximumf>, %70, %cst_47 [1] : vector<8x8xf32> to vector<8xf32>
    %72 = vector.shape_cast %71 : vector<8xf32> to vector<8x1xf32>
    %73 = vector.broadcast %72 : vector<8x1xf32> to vector<8x8xf32>
    %74 = arith.subf %70, %73 : vector<8x8xf32>
    %75 = math.exp %74 : vector<8x8xf32>
    %cst_48 = arith.constant dense<0.000000e+00> : vector<8xf32>
    %76 = vector.multi_reduction <add>, %75, %cst_48 [1] : vector<8x8xf32> to vector<8xf32>
    %77 = vector.shape_cast %76 : vector<8xf32> to vector<8x1xf32>
    %78 = tpu.reciprocal %77 {approx = true} : vector<8x1xf32> -> vector<8x1xf32>
    %79 = arith.mulf %77, %78 : vector<8x1xf32>
    %cst_49 = arith.constant 2.000000e+00 : f32
    %80 = vector.broadcast %cst_49 : f32 to vector<8x1xf32>
    %81 = arith.subf %80, %79 : vector<8x1xf32>
    %82 = arith.mulf %78, %81 : vector<8x1xf32>
    %83 = vector.broadcast %82 : vector<8x1xf32> to vector<8x8xf32>
    %84 = arith.mulf %75, %83 : vector<8x8xf32>
    %c0_50 = arith.constant 0 : index
    %c0_51 = arith.constant 0 : index
    %85 = vector.load %arg24[%c0_50, %c0_51] : memref<8x8xf32, #tpu.memory_space<vmem>>, vector<8x8xf32>
    %86 = arith.addf %85, %84 : vector<8x8xf32>
    %c0_52 = arith.constant 0 : index
    %c0_53 = arith.constant 0 : index
    %87 = vector.load %arg24[%c0_52, %c0_53] : memref<8x8xf32, #tpu.memory_space<vmem>>, vector<8x8xf32>
    tpu.vector_store %arg24[%c0_52, %c0_53], %86 {strides = array<i32>} : memref<8x8xf32, #tpu.memory_space<vmem>>, vector<8x8xf32>,
    %cst_54 = arith.constant dense<0.000000e+00> : vector<8x8xf32>
    %88 = tpu.matmul %84, %69, %cst_54 {dimension_numbers = #tpu.dot_dimension_numbers<[1], [0], [0], [1], [0, 0, 1, 1], [], []>} : vector<8x8xf32>, vector<8x8xf32>, vector<8x8xf32> -> vector<8x8xf32>
    %c0_55 = arith.constant 0 : index
    %c16 = arith.constant 16 : index
    %89 = vector.load %arg23[%c0_55, %c16] : memref<8x32xf32, #tpu.memory_space<vmem>>, vector<8x8xf32>
    tpu.vector_store %arg23[%c0_55, %c16], %88 {strides = array<i32>} : memref<8x32xf32, #tpu.memory_space<vmem>>, vector<8x8xf32>,
    %90 = vector.extract_strided_slice %12 {offsets = [0, 24], sizes = [8, 8], strides = [1, 1]} : vector<8x32xf32> to vector<8x8xf32>
    %c3 = arith.constant 3 : index
    %c0_56 = arith.constant 0 : index
    %c0_57 = arith.constant 0 : index
    %91 = vector.load %arg21[%c3, %c0_56, %c0_57] : memref<4x8x8xf32, #tpu.memory_space<vmem>>, vector<1x8x8xf32>
    %92 = vector.shape_cast %91 : vector<1x8x8xf32> to vector<8x8xf32>
    %c3_58 = arith.constant 3 : index
    %c0_59 = arith.constant 0 : index
    %c0_60 = arith.constant 0 : index
    %93 = vector.load %arg22[%c3_58, %c0_59, %c0_60] : memref<4x8x8xf32, #tpu.memory_space<vmem>>, vector<1x8x8xf32>
    %94 = vector.shape_cast %93 : vector<1x8x8xf32> to vector<8x8xf32>
    %cst_61 = arith.constant dense<0.000000e+00> : vector<8x8xf32>
    %95 = tpu.matmul %90, %92, %cst_61 {dimension_numbers = #tpu.dot_dimension_numbers<[1], [1], [0], [0], [0, 0, 1, 0], [], []>} : vector<8x8xf32>, vector<8x8xf32>, vector<8x8xf32> -> vector<8x8xf32>
    %cst_62 = arith.constant dense<0xFF800000> : vector<8xf32>
    %96 = vector.multi_reduction <maximumf>, %95, %cst_62 [1] : vector<8x8xf32> to vector<8xf32>
    %97 = vector.shape_cast %96 : vector<8xf32> to vector<8x1xf32>
    %98 = vector.broadcast %97 : vector<8x1xf32> to vector<8x8xf32>
    %99 = arith.subf %95, %98 : vector<8x8xf32>
    %100 = math.exp %99 : vector<8x8xf32>
    %cst_63 = arith.constant dense<0.000000e+00> : vector<8xf32>
    %101 = vector.multi_reduction <add>, %100, %cst_63 [1] : vector<8x8xf32> to vector<8xf32>
    %102 = vector.shape_cast %101 : vector<8xf32> to vector<8x1xf32>
    %103 = tpu.reciprocal %102 {approx = true} : vector<8x1xf32> -> vector<8x1xf32>
    %104 = arith.mulf %102, %103 : vector<8x1xf32>
    %cst_64 = arith.constant 2.000000e+00 : f32
    %105 = vector.broadcast %cst_64 : f32 to vector<8x1xf32>
    %106 = arith.subf %105, %104 : vector<8x1xf32>
    %107 = arith.mulf %103, %106 : vector<8x1xf32>
    %108 = vector.broadcast %107 : vector<8x1xf32> to vector<8x8xf32>
    %109 = arith.mulf %100, %108 : vector<8x8xf32>
    %c0_65 = arith.constant 0 : index
    %c0_66 = arith.constant 0 : index
    %110 = vector.load %arg24[%c0_65, %c0_66] : memref<8x8xf32, #tpu.memory_space<vmem>>, vector<8x8xf32>
    %111 = arith.addf %110, %109 : vector<8x8xf32>
    %c0_67 = arith.constant 0 : index
    %c0_68 = arith.constant 0 : index
    %112 = vector.load %arg24[%c0_67, %c0_68] : memref<8x8xf32, #tpu.memory_space<vmem>>, vector<8x8xf32>
    tpu.vector_store %arg24[%c0_67, %c0_68], %111 {strides = array<i32>} : memref<8x8xf32, #tpu.memory_space<vmem>>, vector<8x8xf32>,
    %cst_69 = arith.constant dense<0.000000e+00> : vector<8x8xf32>
    %113 = tpu.matmul %109, %94, %cst_69 {dimension_numbers = #tpu.dot_dimension_numbers<[1], [0], [0], [1], [0, 0, 1, 1], [], []>} : vector<8x8xf32>, vector<8x8xf32>, vector<8x8xf32> -> vector<8x8xf32>
    %c0_70 = arith.constant 0 : index
    %c24 = arith.constant 24 : index
    %114 = vector.load %arg23[%c0_70, %c24] : memref<8x32xf32, #tpu.memory_space<vmem>>, vector<8x8xf32>
    tpu.vector_store %arg23[%c0_70, %c24], %113 {strides = array<i32>} : memref<8x32xf32, #tpu.memory_space<vmem>>, vector<8x8xf32>,
    %c0_71 = arith.constant 0 : index
    %c0_72 = arith.constant 0 : index
    %115 = vector.load %arg23[%c0_71, %c0_72] : memref<8x32xf32, #tpu.memory_space<vmem>>, vector<8x32xf32>
    %c0_73 = arith.constant 0 : index
    %c0_74 = arith.constant 0 : index
    %116 = vector.load %arg9[%c0_73, %c0_74] : memref<32x32xf32, #tpu.memory_space<vmem>>, vector<32x32xf32>
    %cst_75 = arith.constant dense<0.000000e+00> : vector<8x32xf32>
    %117 = tpu.matmul %115, %116, %cst_75 {dimension_numbers = #tpu.dot_dimension_numbers<[1], [0], [0], [1], [0, 0, 1, 1], [], []>} : vector<8x32xf32>, vector<32x32xf32>, vector<8x32xf32> -> vector<8x32xf32>
    %c0_76 = arith.constant 0 : index
    %c0_77 = arith.constant 0 : index
    %118 = vector.load %arg10[%c0_76, %c0_77] : memref<1x32xf32, #tpu.memory_space<vmem>>, vector<1x32xf32>
    %119 = vector.broadcast %118 : vector<1x32xf32> to vector<8x32xf32>
    %120 = arith.addf %117, %119 : vector<8x32xf32>
    %121 = arith.addf %7, %120 : vector<8x32xf32>
    %c0_78 = arith.constant 0 : index
    %c0_79 = arith.constant 0 : index
    %122 = vector.load %arg15[%c0_78, %c0_79] : memref<1x32xf32, #tpu.memory_space<vmem>>, vector<1x32xf32>
    %c0_80 = arith.constant 0 : index
    %c0_81 = arith.constant 0 : index
    %123 = vector.load %arg16[%c0_80, %c0_81] : memref<1x32xf32, #tpu.memory_space<vmem>>, vector<1x32xf32>
    %cst_82 = arith.constant dense<0.000000e+00> : vector<8xf32>
    %124 = vector.multi_reduction <add>, %121, %cst_82 [1] : vector<8x32xf32> to vector<8xf32>
    %125 = vector.shape_cast %124 : vector<8xf32> to vector<8x1xf32>
    %cst_83 = arith.constant 3.200000e+01 : f32
    %126 = vector.broadcast %cst_83 : f32 to vector<8x1xf32>
    %127 = arith.divf %125, %126 : vector<8x1xf32>
    %128 = vector.broadcast %127 : vector<8x1xf32> to vector<8x32xf32>
    %129 = arith.subf %121, %128 : vector<8x32xf32>
    %130 = arith.mulf %129, %129 : vector<8x32xf32>
    %cst_84 = arith.constant dense<0.000000e+00> : vector<8xf32>
    %131 = vector.multi_reduction <add>, %130, %cst_84 [1] : vector<8x32xf32> to vector<8xf32>
    %132 = vector.shape_cast %131 : vector<8xf32> to vector<8x1xf32>
    %cst_85 = arith.constant 3.200000e+01 : f32
    %133 = vector.broadcast %cst_85 : f32 to vector<8x1xf32>
    %134 = arith.divf %132, %133 : vector<8x1xf32>
    %135 = vector.broadcast %127 : vector<8x1xf32> to vector<8x32xf32>
    %136 = arith.subf %121, %135 : vector<8x32xf32>
    %cst_86 = arith.constant 9.99999997E-7 : f32
    %137 = vector.broadcast %cst_86 : f32 to vector<8x1xf32>
    %138 = arith.addf %134, %137 : vector<8x1xf32>
    %139 = math.rsqrt %138 : vector<8x1xf32>
    %140 = vector.broadcast %139 : vector<8x1xf32> to vector<8x32xf32>
    %141 = arith.mulf %136, %140 : vector<8x32xf32>
    %142 = vector.broadcast %122 : vector<1x32xf32> to vector<8x32xf32>
    %143 = arith.mulf %141, %142 : vector<8x32xf32>
    %144 = vector.broadcast %123 : vector<1x32xf32> to vector<8x32xf32>
    %145 = arith.addf %143, %144 : vector<8x32xf32>
    %c0_87 = arith.constant 0 : index
    %c0_88 = arith.constant 0 : index
    %146 = vector.load %arg11[%c0_87, %c0_88] : memref<32x64xf32, #tpu.memory_space<vmem>>, vector<32x64xf32>
    %cst_89 = arith.constant dense<0.000000e+00> : vector<8x64xf32>
    %147 = tpu.matmul %145, %146, %cst_89 {dimension_numbers = #tpu.dot_dimension_numbers<[1], [0], [0], [1], [0, 0, 1, 1], [], []>} : vector<8x32xf32>, vector<32x64xf32>, vector<8x64xf32> -> vector<8x64xf32>
    %c0_90 = arith.constant 0 : index
    %c0_91 = arith.constant 0 : index
    %148 = vector.load %arg12[%c0_90, %c0_91] : memref<1x64xf32, #tpu.memory_space<vmem>>, vector<1x64xf32>
    %149 = vector.broadcast %148 : vector<1x64xf32> to vector<8x64xf32>
    %150 = arith.addf %147, %149 : vector<8x64xf32>
    %cst_92 = arith.constant 0.000000e+00 : f32
    %151 = vector.broadcast %cst_92 : f32 to vector<8x64xf32>
    %152 = arith.maximumf %150, %151 : vector<8x64xf32>
    %c0_93 = arith.constant 0 : index
    %c0_94 = arith.constant 0 : index
    %153 = vector.load %arg13[%c0_93, %c0_94] : memref<64x32xf32, #tpu.memory_space<vmem>>, vector<64x32xf32>
    %cst_95 = arith.constant dense<0.000000e+00> : vector<8x32xf32>
    %154 = tpu.matmul %152, %153, %cst_95 {dimension_numbers = #tpu.dot_dimension_numbers<[1], [0], [0], [1], [0, 0, 1, 1], [], []>} : vector<8x64xf32>, vector<64x32xf32>, vector<8x32xf32> -> vector<8x32xf32>
    %c0_96 = arith.constant 0 : index
    %c0_97 = arith.constant 0 : index
    %155 = vector.load %arg14[%c0_96, %c0_97] : memref<1x32xf32, #tpu.memory_space<vmem>>, vector<1x32xf32>
    %156 = vector.broadcast %155 : vector<1x32xf32> to vector<8x32xf32>
    %157 = arith.addf %154, %156 : vector<8x32xf32>
    %158 = arith.addf %145, %157 : vector<8x32xf32>
    %c0_98 = arith.constant 0 : index
    %c0_99 = arith.constant 0 : index
    %159 = vector.load %arg17[%c0_98, %c0_99] : memref<1x32xf32, #tpu.memory_space<vmem>>, vector<1x32xf32>
    %c0_100 = arith.constant 0 : index
    %c0_101 = arith.constant 0 : index
    %160 = vector.load %arg18[%c0_100, %c0_101] : memref<1x32xf32, #tpu.memory_space<vmem>>, vector<1x32xf32>
    %cst_102 = arith.constant dense<0.000000e+00> : vector<8xf32>
    %161 = vector.multi_reduction <add>, %158, %cst_102 [1] : vector<8x32xf32> to vector<8xf32>
    %162 = vector.shape_cast %161 : vector<8xf32> to vector<8x1xf32>
    %cst_103 = arith.constant 3.200000e+01 : f32
    %163 = vector.broadcast %cst_103 : f32 to vector<8x1xf32>
    %164 = arith.divf %162, %163 : vector<8x1xf32>
    %165 = vector.broadcast %164 : vector<8x1xf32> to vector<8x32xf32>
    %166 = arith.subf %158, %165 : vector<8x32xf32>
    %167 = arith.mulf %166, %166 : vector<8x32xf32>
    %cst_104 = arith.constant dense<0.000000e+00> : vector<8xf32>
    %168 = vector.multi_reduction <add>, %167, %cst_104 [1] : vector<8x32xf32> to vector<8xf32>
    %169 = vector.shape_cast %168 : vector<8xf32> to vector<8x1xf32>
    %cst_105 = arith.constant 3.200000e+01 : f32
    %170 = vector.broadcast %cst_105 : f32 to vector<8x1xf32>
    %171 = arith.divf %169, %170 : vector<8x1xf32>
    %172 = vector.broadcast %164 : vector<8x1xf32> to vector<8x32xf32>
    %173 = arith.subf %158, %172 : vector<8x32xf32>
    %cst_106 = arith.constant 9.99999997E-7 : f32
    %174 = vector.broadcast %cst_106 : f32 to vector<8x1xf32>
    %175 = arith.addf %171, %174 : vector<8x1xf32>
    %176 = math.rsqrt %175 : vector<8x1xf32>
    %177 = vector.broadcast %176 : vector<8x1xf32> to vector<8x32xf32>
    %178 = arith.mulf %173, %177 : vector<8x32xf32>
    %179 = vector.broadcast %159 : vector<1x32xf32> to vector<8x32xf32>
    %180 = arith.mulf %178, %179 : vector<8x32xf32>
    %181 = vector.broadcast %160 : vector<1x32xf32> to vector<8x32xf32>
    %182 = arith.addf %180, %181 : vector<8x32xf32>
    %c0_107 = arith.constant 0 : index
    %c0_108 = arith.constant 0 : index
    %c0_109 = arith.constant 0 : index
    %183 = vector.load %arg19[%c0_107, %c0_108, %c0_109] : memref<1x8x32xf32, #tpu.memory_space<vmem>>, vector<1x8x32xf32>
    %184 = vector.shape_cast %183 : vector<1x8x32xf32> to vector<8x32xf32>
    %185 = vector.shape_cast %182 : vector<8x32xf32> to vector<1x8x32xf32>
    tpu.vector_store %arg19[%c0_107, %c0_108, %c0_109], %185 {strides = array<i32>} : memref<1x8x32xf32, #tpu.memory_space<vmem>>, vector<1x8x32xf32>,
    %c0_110 = arith.constant 0 : index
    %c0_111 = arith.constant 0 : index
    %186 = vector.load %arg24[%c0_110, %c0_111] : memref<8x8xf32, #tpu.memory_space<vmem>>, vector<8x8xf32>
    %cst_112 = arith.constant 2.500000e-01 : f32
    %187 = vector.broadcast %cst_112 : f32 to vector<8x8xf32>
    %188 = arith.mulf %186, %187 : vector<8x8xf32>
    %c0_113 = arith.constant 0 : index
    %c0_114 = arith.constant 0 : index
    %c0_115 = arith.constant 0 : index
    %189 = vector.load %arg20[%c0_113, %c0_114, %c0_115] : memref<1x8x8xf32, #tpu.memory_space<vmem>>, vector<1x8x8xf32>
    %190 = vector.shape_cast %189 : vector<1x8x8xf32> to vector<8x8xf32>
    %191 = vector.shape_cast %188 : vector<8x8xf32> to vector<1x8x8xf32>
    tpu.vector_store %arg20[%c0_113, %c0_114, %c0_115], %191 {strides = array<i32>} : memref<1x8x8xf32, #tpu.memory_space<vmem>>, vector<1x8x8xf32>,
    return
  }
  func.func @transform_0(%arg0: i32, %arg1: i32) -> (i32, i32, i32) {
    %c0_i32 = arith.constant 0 : i32
    %c0_i32_0 = arith.constant 0 : i32
    %c0_i32_1 = arith.constant 0 : i32
    return %arg0, %c0_i32, %c0_i32_0 : i32, i32, i32
  }
  func.func @transform_1(%arg0: i32, %arg1: i32) -> (i32, i32) {
    %c0_i32 = arith.constant 0 : i32
    %c0_i32_0 = arith.constant 0 : i32
    %c0_i32_1 = arith.constant 0 : i32
    return %c0_i32, %c0_i32_0 : i32, i32
  }
  func.func @transform_2(%arg0: i32, %arg1: i32) -> (i32, i32) {
    %c0_i32 = arith.constant 0 : i32
    %c0_i32_0 = arith.constant 0 : i32
    %c0_i32_1 = arith.constant 0 : i32
    return %c0_i32, %c0_i32_0 : i32, i32
  }
  func.func @transform_3(%arg0: i32, %arg1: i32) -> (i32, i32) {
    %c0_i32 = arith.constant 0 : i32
    %c0_i32_0 = arith.constant 0 : i32
    %c0_i32_1 = arith.constant 0 : i32
    return %c0_i32, %c0_i32_0 : i32, i32
  }
  func.func @transform_4(%arg0: i32, %arg1: i32) -> (i32, i32) {
    %c0_i32 = arith.constant 0 : i32
    %c0_i32_0 = arith.constant 0 : i32
    %c0_i32_1 = arith.constant 0 : i32
    return %c0_i32, %c0_i32_0 : i32, i32
  }
  func.func @transform_5(%arg0: i32, %arg1: i32) -> (i32, i32) {
    %c0_i32 = arith.constant 0 : i32
    %c0_i32_0 = arith.constant 0 : i32
    %c0_i32_1 = arith.constant 0 : i32
    return %c0_i32, %c0_i32_0 : i32, i32
  }
  func.func @transform_6(%arg0: i32, %arg1: i32) -> (i32, i32) {
    %c0_i32 = arith.constant 0 : i32
    %c0_i32_0 = arith.constant 0 : i32
    %c0_i32_1 = arith.constant 0 : i32
    return %c0_i32, %c0_i32_0 : i32, i32
  }
  func.func @transform_7(%arg0: i32, %arg1: i32) -> (i32, i32) {
    %c0_i32 = arith.constant 0 : i32
    %c0_i32_0 = arith.constant 0 : i32
    %c0_i32_1 = arith.constant 0 : i32
    return %c0_i32, %c0_i32_0 : i32, i32
  }
  func.func @transform_8(%arg0: i32, %arg1: i32) -> (i32, i32) {
    %c0_i32 = arith.constant 0 : i32
    %c0_i32_0 = arith.constant 0 : i32
    %c0_i32_1 = arith.constant 0 : i32
    return %c0_i32, %c0_i32_0 : i32, i32
  }
  func.func @transform_9(%arg0: i32, %arg1: i32) -> (i32, i32) {
    %c0_i32 = arith.constant 0 : i32
    %c0_i32_0 = arith.constant 0 : i32
    %c0_i32_1 = arith.constant 0 : i32
    return %c0_i32, %c0_i32_0 : i32, i32
  }
  func.func @transform_10(%arg0: i32, %arg1: i32) -> (i32, i32) {
    %c0_i32 = arith.constant 0 : i32
    %c0_i32_0 = arith.constant 0 : i32
    %c0_i32_1 = arith.constant 0 : i32
    return %c0_i32, %c0_i32_0 : i32, i32
  }
  func.func @transform_11(%arg0: i32, %arg1: i32) -> (i32, i32) {
    %c0_i32 = arith.constant 0 : i32
    %c0_i32_0 = arith.constant 0 : i32
    %c0_i32_1 = arith.constant 0 : i32
    return %c0_i32, %c0_i32_0 : i32, i32
  }
  func.func @transform_12(%arg0: i32, %arg1: i32) -> (i32, i32) {
    %c0_i32 = arith.constant 0 : i32
    %c0_i32_0 = arith.constant 0 : i32
    %c0_i32_1 = arith.constant 0 : i32
    return %c0_i32, %c0_i32_0 : i32, i32
  }
  func.func @transform_13(%arg0: i32, %arg1: i32) -> (i32, i32) {
    %c0_i32 = arith.constant 0 : i32
    %c0_i32_0 = arith.constant 0 : i32
    %c0_i32_1 = arith.constant 0 : i32
    return %c0_i32, %c0_i32_0 : i32, i32
  }
  func.func @transform_14(%arg0: i32, %arg1: i32) -> (i32, i32) {
    %c0_i32 = arith.constant 0 : i32
    %c0_i32_0 = arith.constant 0 : i32
    %c0_i32_1 = arith.constant 0 : i32
    return %c0_i32, %c0_i32_0 : i32, i32
  }
  func.func @transform_15(%arg0: i32, %arg1: i32) -> (i32, i32) {
    %c0_i32 = arith.constant 0 : i32
    %c0_i32_0 = arith.constant 0 : i32
    %c0_i32_1 = arith.constant 0 : i32
    return %c0_i32, %c0_i32_0 : i32, i32
  }
  func.func @transform_16(%arg0: i32, %arg1: i32) -> (i32, i32) {
    %c0_i32 = arith.constant 0 : i32
    %c0_i32_0 = arith.constant 0 : i32
    %c0_i32_1 = arith.constant 0 : i32
    return %c0_i32, %c0_i32_0 : i32, i32
  }
  func.func @transform_17(%arg0: i32, %arg1: i32) -> (i32, i32, i32) {
    %c0_i32 = arith.constant 0 : i32
    %c0_i32_0 = arith.constant 0 : i32
    return %arg0, %arg1, %c0_i32 : i32, i32, i32
  }
  func.func @transform_18(%arg0: i32, %arg1: i32) -> (i32, i32, i32) {
    %c0_i32 = arith.constant 0 : i32
    %c0_i32_0 = arith.constant 0 : i32
    return %arg0, %arg1, %c0_i32 : i32, i32, i32
  }
}

</mosaic_0001>

<llo_original>
// kernel: tpu_custom_call.1
$region0: #{tpu_custom_call.1}
  #allocation0 [shape = 'u32[]', space=smem, size = 0x4, offset = 0x4, fixed_abs, tag = 'smem constant byte address 0x4 - core index']
  #allocation1 [shape = 'u32[72,128]{1,0:T(1,128)}', space=vmem, size = 0x9000, scoped, tag = 'internal scratch']
  #allocation2 [shape = 'f32[4,8,8]{2,1,0:T(8,128)}', space=vmem, size = 0x4000, scoped, tag = 'scratch operand']
  #allocation3 [shape = 'f32[4,8,8]{2,1,0:T(8,128)}', space=vmem, size = 0x4000, scoped, tag = 'scratch operand']
  #allocation4 [shape = 'f32[8,32]{1,0:T(8,128)}', space=vmem, size = 0x1000, scoped, tag = 'scratch operand']
  #allocation5 [shape = 'f32[8,8]{1,0:T(8,128)}', space=vmem, size = 0x1000, scoped, tag = 'scratch operand']
  %s0 = inlined_call_operand.hbm [shape: f32[2,8,32], index: 0, kind: input, shape index: {}]
  %s1 = inlined_call_operand.vmem [shape: f32[32,32], index: 1, kind: input, shape index: {}]
  %s2 = inlined_call_operand.vmem [shape: f32[1,32], index: 2, kind: input, shape index: {}]
  %s3 = inlined_call_operand.vmem [shape: f32[32,32], index: 3, kind: input, shape index: {}]
  %s4 = inlined_call_operand.vmem [shape: f32[1,32], index: 4, kind: input, shape index: {}]
  %s5 = inlined_call_operand.vmem [shape: f32[32,32], index: 5, kind: input, shape index: {}]
  %s6 = inlined_call_operand.vmem [shape: f32[1,32], index: 6, kind: input, shape index: {}]
  %s7 = inlined_call_operand.hbm [shape: f32[32,32], index: 7, kind: input, shape index: {}]
  %s8 = inlined_call_operand.vmem [shape: f32[1,32], index: 8, kind: input, shape index: {}]
  %s9 = inlined_call_operand.hbm [shape: f32[32,64], index: 9, kind: input, shape index: {}]
  %s10 = inlined_call_operand.vmem [shape: f32[1,64], index: 10, kind: input, shape index: {}]
  %s11 = inlined_call_operand.vmem [shape: f32[64,32], index: 11, kind: input, shape index: {}]
  %s12 = inlined_call_operand.vmem [shape: f32[1,32], index: 12, kind: input, shape index: {}]
  %s13 = inlined_call_operand.vmem [shape: f32[1,32], index: 13, kind: input, shape index: {}]
  %s14 = inlined_call_operand.vmem [shape: f32[1,32], index: 14, kind: input, shape index: {}]
  %s15 = inlined_call_operand.vmem [shape: f32[1,32], index: 15, kind: input, shape index: {}]
  %s16 = inlined_call_operand.vmem [shape: f32[1,32], index: 16, kind: input, shape index: {}]
  %s17 = inlined_call_operand.hbm [shape: f32[2,8,32], index: 17, kind: output, shape index: {0}]
  %s18 = inlined_call_operand.hbm [shape: f32[2,8,8], index: 18, kind: output, shape index: {1}]
  %19 = xla_tuple %s17, %s18
  %s20 = sld [smem:[#allocation0]]
  $region125: #{tpu_custom_call.1} parent=0
    _
  %s22 = ssub.s32 1, %s20
  %s23 = scalar_select 0, %s22, %s20
  $region1: #{tpu_custom_call.1} parent=0
    #allocation6 [shape = 'u8[8192]{0}', space=vmem, size = 0x2000, scoped, tag = 'input window, operand 0']
    #allocation7 [shape = 's32[2]{0}', space=sflag, size = 0x8, scoped, tag = 'scoped memory for tpu_custom_call.1']
    #allocation8 [shape = 's32[2]{0}', space=sflag, size = 0x8, scoped, tag = 'scoped memory for tpu_custom_call.1']
    #allocation9 [shape = 'u8[16384]{0}', space=vmem, size = 0x4000, scoped, tag = 'input window, operand 7, single buffered']
    #allocation10 [shape = 's32[1]{0}', space=sflag, size = 0x4, scoped, tag = 'scoped memory for tpu_custom_call.1']
    #allocation11 [shape = 'u8[16384]{0}', space=vmem, size = 0x4000, scoped, tag = 'input window, operand 9, single buffered']
    #allocation12 [shape = 'u8[8192]{0}', space=vmem, size = 0x2000, scoped, tag = 'output window, operand 0']
    #allocation13 [shape = 'u8[8192]{0}', space=vmem, size = 0x2000, scoped, tag = 'output window, operand 1']
    #allocation14 [shape = 's32[2]{0}', space=sflag, size = 0x8, scoped, tag = 'scoped memory for tpu_custom_call.1']
    %24 = vsyncpa [#allocation7], 0
    %s25 = scalar_lea.sflag [#allocation7], 1
    %26 = vsyncpa %s25, 0
    %27 = vsyncpa [#allocation10], 0
    %28 = vsyncpa [#allocation8], 0
    %s29 = scalar_lea.sflag [#allocation8], 1
    %30 = vsyncpa %s29, 0
    %31 = vsyncpa [#allocation14], 0
    %s32 = scalar_lea.sflag [#allocation14], 1
    %33 = vsyncpa %s32, 0
    loop: start=0, step=1, limit=4
    $region2: #{tpu_custom_call.1} parent=1 // loop_pre_header
      _
    $region3: #{tpu_custom_call.1} parent=1 // loop_header
      %s35 = sphi 0, %s39
      %p36 = scmp.ge.s32.totalorder %s35, 4
      %s42 = sphi 0, %s54
      %s43 = sphi 0, %s50
      %s44 = sphi 0, %s42
      %s45 = sphi 0, %s43
      %s46 = sphi 0, %s44
      %s47 = sphi 0, %s45
      %s57 = sphi 0, %s59
      %s60 = sphi 0, %s57
      %s61 = sphi 0, %s60
      %s77 = sphi 0, %s61
      %s81 = sphi 0, %s81
      %s83 = sphi 0, %s81
      %s84 = sphi 0, %s83
      %s98 = sphi 0, %s84
      %s102 = sphi 0, %s102
      %s104 = sphi 0, %s102
      %s105 = sphi 0, %s104
      %s119 = sphi 0, %s105
      %s123 = sphi 0, %s123
      %s125 = sphi 0, %s123
      %s126 = sphi 0, %s125
      %s140 = sphi 0, %s126
      %s144 = sphi 0, %s144
      %s146 = sphi 0, %s144
      %s147 = sphi 0, %s146
      %s161 = sphi 0, %s147
      %s165 = sphi 0, %s165
      %s167 = sphi 0, %s165
      %s168 = sphi 0, %s167
      %s182 = sphi 0, %s168
      %s186 = sphi 0, %s186
      %s188 = sphi 0, %s186
      %s189 = sphi 0, %s188
      %s203 = sphi 0, %s189
      %s207 = sphi 0, %s207
      %s209 = sphi 0, %s207
      %s210 = sphi 0, %s209
      %s224 = sphi 0, %s210
      %s228 = sphi 0, %s228
      %s230 = sphi 0, %s228
      %s231 = sphi 0, %s230
      %s245 = sphi 0, %s231
      %s249 = sphi 0, %s249
      %s251 = sphi 0, %s249
      %s252 = sphi 0, %s251
      %s266 = sphi 0, %s252
      %s270 = sphi 0, %s270
      %s272 = sphi 0, %s270
      %s273 = sphi 0, %s272
      %s287 = sphi 0, %s273
      %s291 = sphi 0, %s291
      %s293 = sphi 0, %s291
      %s294 = sphi 0, %s293
      %s308 = sphi 0, %s294
      %s312 = sphi 0, %s312
      %s314 = sphi 0, %s312
      %s315 = sphi 0, %s314
      %s329 = sphi 0, %s315
      %s333 = sphi 0, %s333
      %s335 = sphi 0, %s333
      %s336 = sphi 0, %s335
      %s350 = sphi 0, %s336
      %s354 = sphi 0, %s354
      %s356 = sphi 0, %s354
      %s357 = sphi 0, %s356
      %s371 = sphi 0, %s357
      %s375 = sphi 0, %s375
      %s377 = sphi 0, %s375
      %s378 = sphi 0, %s377
      %s392 = sphi 0, %s378
      %s396 = sphi 0, %s396
      %s398 = sphi 0, %s396
      %s399 = sphi 0, %s398
      %s413 = sphi 0, %s399
      %s421 = sphi 0, %s423
      %s424 = sphi 0, %s421
      %s425 = sphi 0, %s424
      %s441 = sphi 0, %s425
      %s449 = sphi 0, %s451
      %s452 = sphi 0, %s449
      %s453 = sphi 0, %s452
      %s469 = sphi 0, %s453
    $region4: #{tpu_custom_call.1} parent=1 // loop_header_branch
      %38 = sbr.rel (%p36) target = $region8
    $region5: #{tpu_custom_call.1} parent=1 // loop_body
      %s40 = ssub.s32 %s35, 1
      %s41 = ssub.s32 %s35, 2
      %s48 = sadd.s32 1, %s43
      %p49 = scmp.ge.s32.totalorder %s48, 1
      %s50 = scalar_select %p49, 0, %s48
      %s51 = sadd.s32 1, %s42
      %s52 = scalar_select %p49, %s51, %s42
      %p53 = scmp.ge.s32.totalorder %s52, 2
      %s54 = scalar_select %p53, 0, %s52
      %s55 = ssub.s32 %s42, %s54
      %p56 = scmp.eq.s32.totalorder %s55, 0
      %s58 = sadd.s32 %s57, 1
      %s59 = scalar_select %p56, %s57, %s58
      %p62 = pneg %p56
      %p63 = scmp.eq.s32.totalorder %s35, 1
      %p64 = por %p62, %p63
      %p65 = scmp.ne.s32.totalorder %s57, %s60
      %p66 = scmp.eq.s32.totalorder %s35, 0
      %p67 = por %p65, %p66
      %p68 = scmp.ne.s32.totalorder %s57, %s60
      %p69 = scmp.eq.s32.totalorder %s40, 1
      %p70 = por %p68, %p69
      %p71 = scmp.ne.s32.totalorder %s60, %s61
      %p72 = scmp.eq.s32.totalorder %s40, 0
      %p73 = por %p71, %p72
      %p74 = scmp.ne.s32.totalorder %s60, %s61
      %p75 = scmp.eq.s32.totalorder %s41, 1
      %p76 = por %p74, %p75
      %p78 = scmp.ne.s32.totalorder %s61, %s77
      %p79 = scmp.eq.s32.totalorder %s41, 0
      %p80 = por %p78, %p79
      %s82 = sadd.s32 %s81, 1
      %p85 = scmp.eq.s32.totalorder %s35, 1
      %p86 = scmp.ne.s32.totalorder %s81, %s83
      %p87 = scmp.eq.s32.totalorder %s35, 0
      %p88 = por %p86, %p87
      %p89 = scmp.ne.s32.totalorder %s81, %s83
      %p90 = scmp.eq.s32.totalorder %s40, 1
      %p91 = por %p89, %p90
      %p92 = scmp.ne.s32.totalorder %s83, %s84
      %p93 = scmp.eq.s32.totalorder %s40, 0
      %p94 = por %p92, %p93
      %p95 = scmp.ne.s32.totalorder %s83, %s84
      %p96 = scmp.eq.s32.totalorder %s41, 1
      %p97 = por %p95, %p96
      %p99 = scmp.ne.s32.totalorder %s84, %s98
      %p100 = scmp.eq.s32.totalorder %s41, 0
      %p101 = por %p99, %p100
      %s103 = sadd.s32 %s102, 1
      %p106 = scmp.eq.s32.totalorder %s35, 1
      %p107 = scmp.ne.s32.totalorder %s102, %s104
      %p108 = scmp.eq.s32.totalorder %s35, 0
      %p109 = por %p107, %p108
      %p110 = scmp.ne.s32.totalorder %s102, %s104
      %p111 = scmp.eq.s32.totalorder %s40, 1
      %p112 = por %p110, %p111
      %p113 = scmp.ne.s32.totalorder %s104, %s105
      %p114 = scmp.eq.s32.totalorder %s40, 0
      %p115 = por %p113, %p114
      %p116 = scmp.ne.s32.totalorder %s104, %s105
      %p117 = scmp.eq.s32.totalorder %s41, 1
      %p118 = por %p116, %p117
      %p120 = scmp.ne.s32.totalorder %s105, %s119
      %p121 = scmp.eq.s32.totalorder %s41, 0
      %p122 = por %p120, %p121
      %s124 = sadd.s32 %s123, 1
      %p127 = scmp.eq.s32.totalorder %s35, 1
      %p128 = scmp.ne.s32.totalorder %s123, %s125
      %p129 = scmp.eq.s32.totalorder %s35, 0
      %p130 = por %p128, %p129
      %p131 = scmp.ne.s32.totalorder %s123, %s125
      %p132 = scmp.eq.s32.totalorder %s40, 1
      %p133 = por %p131, %p132
      %p134 = scmp.ne.s32.totalorder %s125, %s126
      %p135 = scmp.eq.s32.totalorder %s40, 0
      %p136 = por %p134, %p135
      %p137 = scmp.ne.s32.totalorder %s125, %s126
      %p138 = scmp.eq.s32.totalorder %s41, 1
      %p139 = por %p137, %p138
      %p141 = scmp.ne.s32.totalorder %s126, %s140
      %p142 = scmp.eq.s32.totalorder %s41, 0
      %p143 = por %p141, %p142
      %s145 = sadd.s32 %s144, 1
      %p148 = scmp.eq.s32.totalorder %s35, 1
      %p149 = scmp.ne.s32.totalorder %s144, %s146
      %p150 = scmp.eq.s32.totalorder %s35, 0
      %p151 = por %p149, %p150
      %p152 = scmp.ne.s32.totalorder %s144, %s146
      %p153 = scmp.eq.s32.totalorder %s40, 1
      %p154 = por %p152, %p153
      %p155 = scmp.ne.s32.totalorder %s146, %s147
      %p156 = scmp.eq.s32.totalorder %s40, 0
      %p157 = por %p155, %p156
      %p158 = scmp.ne.s32.totalorder %s146, %s147
      %p159 = scmp.eq.s32.totalorder %s41, 1
      %p160 = por %p158, %p159
      %p162 = scmp.ne.s32.totalorder %s147, %s161
      %p163 = scmp.eq.s32.totalorder %s41, 0
      %p164 = por %p162, %p163
      %s166 = sadd.s32 %s165, 1
      %p169 = scmp.eq.s32.totalorder %s35, 1
      %p170 = scmp.ne.s32.totalorder %s165, %s167
      %p171 = scmp.eq.s32.totalorder %s35, 0
      %p172 = por %p170, %p171
      %p173 = scmp.ne.s32.totalorder %s165, %s167
      %p174 = scmp.eq.s32.totalorder %s40, 1
      %p175 = por %p173, %p174
      %p176 = scmp.ne.s32.totalorder %s167, %s168
      %p177 = scmp.eq.s32.totalorder %s40, 0
      %p178 = por %p176, %p177
      %p179 = scmp.ne.s32.totalorder %s167, %s168
      %p180 = scmp.eq.s32.totalorder %s41, 1
      %p181 = por %p179, %p180
      %p183 = scmp.ne.s32.totalorder %s168, %s182
      %p184 = scmp.eq.s32.totalorder %s41, 0
      %p185 = por %p183, %p184
      %s187 = sadd.s32 %s186, 1
      %p190 = scmp.eq.s32.totalorder %s35, 1
      %p191 = scmp.ne.s32.totalorder %s186, %s188
      %p192 = scmp.eq.s32.totalorder %s35, 0
      %p193 = por %p191, %p192
      %p194 = scmp.ne.s32.totalorder %s186, %s188
      %p195 = scmp.eq.s32.totalorder %s40, 1
      %p196 = por %p194, %p195
      %p197 = scmp.ne.s32.totalorder %s188, %s189
      %p198 = scmp.eq.s32.totalorder %s40, 0
      %p199 = por %p197, %p198
      %p200 = scmp.ne.s32.totalorder %s188, %s189
      %p201 = scmp.eq.s32.totalorder %s41, 1
      %p202 = por %p200, %p201
      %p204 = scmp.ne.s32.totalorder %s189, %s203
      %p205 = scmp.eq.s32.totalorder %s41, 0
      %p206 = por %p204, %p205
      %s208 = sadd.s32 %s207, 1
      %p211 = scmp.eq.s32.totalorder %s35, 1
      %p212 = scmp.ne.s32.totalorder %s207, %s209
      %p213 = scmp.eq.s32.totalorder %s35, 0
      %p214 = por %p212, %p213
      %p215 = scmp.ne.s32.totalorder %s207, %s209
      %p216 = scmp.eq.s32.totalorder %s40, 1
      %p217 = por %p215, %p216
      %p218 = scmp.ne.s32.totalorder %s209, %s210
      %p219 = scmp.eq.s32.totalorder %s40, 0
      %p220 = por %p218, %p219
      %p221 = scmp.ne.s32.totalorder %s209, %s210
      %p222 = scmp.eq.s32.totalorder %s41, 1
      %p223 = por %p221, %p222
      %p225 = scmp.ne.s32.totalorder %s210, %s224
      %p226 = scmp.eq.s32.totalorder %s41, 0
      %p227 = por %p225, %p226
      %s229 = sadd.s32 %s228, 1
      %p232 = scmp.eq.s32.totalorder %s35, 1
      %p233 = scmp.ne.s32.totalorder %s228, %s230
      %p234 = scmp.eq.s32.totalorder %s35, 0
      %p235 = por %p233, %p234
      %p236 = scmp.ne.s32.totalorder %s228, %s230
      %p237 = scmp.eq.s32.totalorder %s40, 1
      %p238 = por %p236, %p237
      %p239 = scmp.ne.s32.totalorder %s230, %s231
      %p240 = scmp.eq.s32.totalorder %s40, 0
      %p241 = por %p239, %p240
      %p242 = scmp.ne.s32.totalorder %s230, %s231
      %p243 = scmp.eq.s32.totalorder %s41, 1
      %p244 = por %p242, %p243
      %p246 = scmp.ne.s32.totalorder %s231, %s245
      %p247 = scmp.eq.s32.totalorder %s41, 0
      %p248 = por %p246, %p247
      %s250 = sadd.s32 %s249, 1
      %p253 = scmp.eq.s32.totalorder %s35, 1
      %p254 = scmp.ne.s32.totalorder %s249, %s251
      %p255 = scmp.eq.s32.totalorder %s35, 0
      %p256 = por %p254, %p255
      %p257 = scmp.ne.s32.totalorder %s249, %s251
      %p258 = scmp.eq.s32.totalorder %s40, 1
      %p259 = por %p257, %p258
      %p260 = scmp.ne.s32.totalorder %s251, %s252
      %p261 = scmp.eq.s32.totalorder %s40, 0
      %p262 = por %p260, %p261
      %p263 = scmp.ne.s32.totalorder %s251, %s252
      %p264 = scmp.eq.s32.totalorder %s41, 1
      %p265 = por %p263, %p264
      %p267 = scmp.ne.s32.totalorder %s252, %s266
      %p268 = scmp.eq.s32.totalorder %s41, 0
      %p269 = por %p267, %p268
      %s271 = sadd.s32 %s270, 1
      %p274 = scmp.eq.s32.totalorder %s35, 1
      %p275 = scmp.ne.s32.totalorder %s270, %s272
      %p276 = scmp.eq.s32.totalorder %s35, 0
      %p277 = por %p275, %p276
      %p278 = scmp.ne.s32.totalorder %s270, %s272
      %p279 = scmp.eq.s32.totalorder %s40, 1
      %p280 = por %p278, %p279
      %p281 = scmp.ne.s32.totalorder %s272, %s273
      %p282 = scmp.eq.s32.totalorder %s40, 0
      %p283 = por %p281, %p282
      %p284 = scmp.ne.s32.totalorder %s272, %s273
      %p285 = scmp.eq.s32.totalorder %s41, 1
      %p286 = por %p284, %p285
      %p288 = scmp.ne.s32.totalorder %s273, %s287
      %p289 = scmp.eq.s32.totalorder %s41, 0
      %p290 = por %p288, %p289
      %s292 = sadd.s32 %s291, 1
      %p295 = scmp.eq.s32.totalorder %s35, 1
      %p296 = scmp.ne.s32.totalorder %s291, %s293
      %p297 = scmp.eq.s32.totalorder %s35, 0
      %p298 = por %p296, %p297
      %p299 = scmp.ne.s32.totalorder %s291, %s293
      %p300 = scmp.eq.s32.totalorder %s40, 1
      %p301 = por %p299, %p300
      %p302 = scmp.ne.s32.totalorder %s293, %s294
      %p303 = scmp.eq.s32.totalorder %s40, 0
      %p304 = por %p302, %p303
      %p305 = scmp.ne.s32.totalorder %s293, %s294
      %p306 = scmp.eq.s32.totalorder %s41, 1
      %p307 = por %p305, %p306
      %p309 = scmp.ne.s32.totalorder %s294, %s308
      %p310 = scmp.eq.s32.totalorder %s41, 0
      %p311 = por %p309, %p310
      %s313 = sadd.s32 %s312, 1
      %p316 = scmp.eq.s32.totalorder %s35, 1
      %p317 = scmp.ne.s32.totalorder %s312, %s314
      %p318 = scmp.eq.s32.totalorder %s35, 0
      %p319 = por %p317, %p318
      %p320 = scmp.ne.s32.totalorder %s312, %s314
      %p321 = scmp.eq.s32.totalorder %s40, 1
      %p322 = por %p320, %p321
      %p323 = scmp.ne.s32.totalorder %s314, %s315
      %p324 = scmp.eq.s32.totalorder %s40, 0
      %p325 = por %p323, %p324
      %p326 = scmp.ne.s32.totalorder %s314, %s315
      %p327 = scmp.eq.s32.totalorder %s41, 1
      %p328 = por %p326, %p327
      %p330 = scmp.ne.s32.totalorder %s315, %s329
      %p331 = scmp.eq.s32.totalorder %s41, 0
      %p332 = por %p330, %p331
      %s334 = sadd.s32 %s333, 1
      %p337 = scmp.eq.s32.totalorder %s35, 1
      %p338 = scmp.ne.s32.totalorder %s333, %s335
      %p339 = scmp.eq.s32.totalorder %s35, 0
      %p340 = por %p338, %p339
      %p341 = scmp.ne.s32.totalorder %s333, %s335
      %p342 = scmp.eq.s32.totalorder %s40, 1
      %p343 = por %p341, %p342
      %p344 = scmp.ne.s32.totalorder %s335, %s336
      %p345 = scmp.eq.s32.totalorder %s40, 0
      %p346 = por %p344, %p345
      %p347 = scmp.ne.s32.totalorder %s335, %s336
      %p348 = scmp.eq.s32.totalorder %s41, 1
      %p349 = por %p347, %p348
      %p351 = scmp.ne.s32.totalorder %s336, %s350
      %p352 = scmp.eq.s32.totalorder %s41, 0
      %p353 = por %p351, %p352
      %s355 = sadd.s32 %s354, 1
      %p358 = scmp.eq.s32.totalorder %s35, 1
      %p359 = scmp.ne.s32.totalorder %s354, %s356
      %p360 = scmp.eq.s32.totalorder %s35, 0
      %p361 = por %p359, %p360
      %p362 = scmp.ne.s32.totalorder %s354, %s356
      %p363 = scmp.eq.s32.totalorder %s40, 1
      %p364 = por %p362, %p363
      %p365 = scmp.ne.s32.totalorder %s356, %s357
      %p366 = scmp.eq.s32.totalorder %s40, 0
      %p367 = por %p365, %p366
      %p368 = scmp.ne.s32.totalorder %s356, %s357
      %p369 = scmp.eq.s32.totalorder %s41, 1
      %p370 = por %p368, %p369
      %p372 = scmp.ne.s32.totalorder %s357, %s371
      %p373 = scmp.eq.s32.totalorder %s41, 0
      %p374 = por %p372, %p373
      %s376 = sadd.s32 %s375, 1
      %p379 = scmp.eq.s32.totalorder %s35, 1
      %p380 = scmp.ne.s32.totalorder %s375, %s377
      %p381 = scmp.eq.s32.totalorder %s35, 0
      %p382 = por %p380, %p381
      %p383 = scmp.ne.s32.totalorder %s375, %s377
      %p384 = scmp.eq.s32.totalorder %s40, 1
      %p385 = por %p383, %p384
      %p386 = scmp.ne.s32.totalorder %s377, %s378
      %p387 = scmp.eq.s32.totalorder %s40, 0
      %p388 = por %p386, %p387
      %p389 = scmp.ne.s32.totalorder %s377, %s378
      %p390 = scmp.eq.s32.totalorder %s41, 1
      %p391 = por %p389, %p390
      %p393 = scmp.ne.s32.totalorder %s378, %s392
      %p394 = scmp.eq.s32.totalorder %s41, 0
      %p395 = por %p393, %p394
      %s397 = sadd.s32 %s396, 1
      %p400 = scmp.eq.s32.totalorder %s35, 1
      %p401 = scmp.ne.s32.totalorder %s396, %s398
      %p402 = scmp.eq.s32.totalorder %s35, 0
      %p403 = por %p401, %p402
      %p404 = scmp.ne.s32.totalorder %s396, %s398
      %p405 = scmp.eq.s32.totalorder %s40, 1
      %p406 = por %p404, %p405
      %p407 = scmp.ne.s32.totalorder %s398, %s399
      %p408 = scmp.eq.s32.totalorder %s40, 0
      %p409 = por %p407, %p408
      %p410 = scmp.ne.s32.totalorder %s398, %s399
      %p411 = scmp.eq.s32.totalorder %s41, 1
      %p412 = por %p410, %p411
      %p414 = scmp.ne.s32.totalorder %s399, %s413
      %p415 = scmp.eq.s32.totalorder %s41, 0
      %p416 = por %p414, %p415
      %s417 = ssub.s32 %s42, %s54
      %s418 = ssub.s32 %s43, %s50
      %s419 = sor.u32 %s417, %s418
      %p420 = scmp.eq.s32.totalorder %s419, 0
      %s422 = sadd.s32 %s421, 1
      %s423 = scalar_select %p420, %s421, %s422
      %p426 = pneg %p420
      %p427 = scmp.eq.s32.totalorder %s35, 1
      %p428 = por %p426, %p427
      %p429 = scmp.ne.s32.totalorder %s421, %s424
      %p430 = scmp.eq.s32.totalorder %s35, 0
      %p431 = por %p429, %p430
      %p432 = scmp.ne.s32.totalorder %s421, %s424
      %p433 = scmp.eq.s32.totalorder %s40, 1
      %p434 = por %p432, %p433
      %p435 = scmp.ne.s32.totalorder %s424, %s425
      %p436 = scmp.eq.s32.totalorder %s40, 0
      %p437 = por %p435, %p436
      %p438 = scmp.ne.s32.totalorder %s424, %s425
      %p439 = scmp.eq.s32.totalorder %s41, 1
      %p440 = por %p438, %p439
      %p442 = scmp.ne.s32.totalorder %s425, %s441
      %p443 = scmp.eq.s32.totalorder %s41, 0
      %p444 = por %p442, %p443
      %s445 = ssub.s32 %s42, %s54
      %s446 = ssub.s32 %s43, %s50
      %s447 = sor.u32 %s445, %s446
      %p448 = scmp.eq.s32.totalorder %s447, 0
      %s450 = sadd.s32 %s449, 1
      %s451 = scalar_select %p448, %s449, %s450
      %p454 = pneg %p448
      %p455 = scmp.eq.s32.totalorder %s35, 1
      %p456 = por %p454, %p455
      %p457 = scmp.ne.s32.totalorder %s449, %s452
      %p458 = scmp.eq.s32.totalorder %s35, 0
      %p459 = por %p457, %p458
      %p460 = scmp.ne.s32.totalorder %s449, %s452
      %p461 = scmp.eq.s32.totalorder %s40, 1
      %p462 = por %p460, %p461
      %p463 = scmp.ne.s32.totalorder %s452, %s453
      %p464 = scmp.eq.s32.totalorder %s40, 0
      %p465 = por %p463, %p464
      %p466 = scmp.ne.s32.totalorder %s452, %s453
      %p467 = scmp.eq.s32.totalorder %s41, 1
      %p468 = por %p466, %p467
      %p470 = scmp.ne.s32.totalorder %s453, %s469
      %p471 = scmp.eq.s32.totalorder %s41, 0
      %p472 = por %p470, %p471
      %p473 = scmp.le.s32.totalorder 1, %s35
      %p474 = scmp.lt.s32.totalorder %s35, 3
      %p475 = pnand %p473, %p474
      %p476 = pneg %p475
      // Predicated region
      $region9: #{tpu_custom_call.1} parent=5 // pred_check
        _
      $region10: #{tpu_custom_call.1} parent=5 // pred_check_branch
        %478 = sbr.rel (%p475) target = $region12
      $region11: #{tpu_custom_call.1} parent=5 // pred_region
        %s479 = ssub.s32 %s35, 1
        // Predicated region
        $region13: #{tpu_custom_call.1} parent=11 // pred_check
          %p480 = pneg %p94
        $region14: #{tpu_custom_call.1} parent=11 // pred_check_branch
          %482 = sbr.rel (%p480) target = $region16
        $region15: #{tpu_custom_call.1} parent=11 // pred_region
          _
        $region16: #{tpu_custom_call.1} parent=11 // pred_fallthru
          _
        // Predicated region
        $region17: #{tpu_custom_call.1} parent=11 // pred_check
          %p483 = pneg %p115
        $region18: #{tpu_custom_call.1} parent=11 // pred_check_branch
          %485 = sbr.rel (%p483) target = $region20
        $region19: #{tpu_custom_call.1} parent=11 // pred_region
          _
        $region20: #{tpu_custom_call.1} parent=11 // pred_fallthru
          _
        // Predicated region
        $region21: #{tpu_custom_call.1} parent=11 // pred_check
          %p486 = pneg %p136
        $region22: #{tpu_custom_call.1} parent=11 // pred_check_branch
          %488 = sbr.rel (%p486) target = $region24
        $region23: #{tpu_custom_call.1} parent=11 // pred_region
          _
        $region24: #{tpu_custom_call.1} parent=11 // pred_fallthru
          _
        // Predicated region
        $region25: #{tpu_custom_call.1} parent=11 // pred_check
          %p489 = pneg %p157
        $region26: #{tpu_custom_call.1} parent=11 // pred_check_branch
          %491 = sbr.rel (%p489) target = $region28
        $region27: #{tpu_custom_call.1} parent=11 // pred_region
          _
        $region28: #{tpu_custom_call.1} parent=11 // pred_fallthru
          _
        // Predicated region
        $region29: #{tpu_custom_call.1} parent=11 // pred_check
          %p492 = pneg %p178
        $region30: #{tpu_custom_call.1} parent=11 // pred_check_branch
          %494 = sbr.rel (%p492) target = $region32
        $region31: #{tpu_custom_call.1} parent=11 // pred_region
          _
        $region32: #{tpu_custom_call.1} parent=11 // pred_fallthru
          _
        // Predicated region
        $region33: #{tpu_custom_call.1} parent=11 // pred_check
          %p495 = pneg %p199
        $region34: #{tpu_custom_call.1} parent=11 // pred_check_branch
          %497 = sbr.rel (%p495) target = $region36
        $region35: #{tpu_custom_call.1} parent=11 // pred_region
          _
        $region36: #{tpu_custom_call.1} parent=11 // pred_fallthru
          _
        // Predicated region
        $region37: #{tpu_custom_call.1} parent=11 // pred_check
          %p498 = pneg %p220
        $region38: #{tpu_custom_call.1} parent=11 // pred_check_branch
          %500 = sbr.rel (%p498) target = $region40
        $region39: #{tpu_custom_call.1} parent=11 // pred_region
          %502 = vsyncadd [#allocation10], 0
          %s503 = sshll.u32 %s7, 4
          %s504 = int_to_ptr.hbm [resolvable:$true] %s503
          %s505 = sshll.u32 [#allocation9], 4
          %s506 = int_to_ptr.vmem [resolvable:$true] %s505
          %511 = dma.hbm_to_vmem [thread:$0]  %s504, 512, %s506, [#allocation10], 128, 128, 8
        $region40: #{tpu_custom_call.1} parent=11 // pred_fallthru
          _
        // Predicated region
        $region41: #{tpu_custom_call.1} parent=11 // pred_check
          %p512 = pneg %p241
        $region42: #{tpu_custom_call.1} parent=11 // pred_check_branch
          %514 = sbr.rel (%p512) target = $region44
        $region43: #{tpu_custom_call.1} parent=11 // pred_region
          _
        $region44: #{tpu_custom_call.1} parent=11 // pred_fallthru
          _
        // Predicated region
        $region45: #{tpu_custom_call.1} parent=11 // pred_check
          %p515 = pneg %p262
        $region46: #{tpu_custom_call.1} parent=11 // pred_check_branch
          %517 = sbr.rel (%p515) target = $region48
        $region47: #{tpu_custom_call.1} parent=11 // pred_region
          %519 = vsyncadd [#allocation10], 0
          %s520 = sshll.u32 %s9, 4
          %s521 = int_to_ptr.hbm [resolvable:$true] %s520
          %s522 = sshll.u32 [#allocation11], 4
          %s523 = int_to_ptr.vmem [resolvable:$true] %s522
          %528 = dma.hbm_to_vmem [thread:$0]  %s521, 512, %s523, [#allocation10], 128, 128, 8
        $region48: #{tpu_custom_call.1} parent=11 // pred_fallthru
          _
        // Predicated region
        $region49: #{tpu_custom_call.1} parent=11 // pred_check
          %p529 = pneg %p283
        $region50: #{tpu_custom_call.1} parent=11 // pred_check_branch
          %531 = sbr.rel (%p529) target = $region52
        $region51: #{tpu_custom_call.1} parent=11 // pred_region
          _
        $region52: #{tpu_custom_call.1} parent=11 // pred_fallthru
          _
        // Predicated region
        $region53: #{tpu_custom_call.1} parent=11 // pred_check
          %p532 = pneg %p304
        $region54: #{tpu_custom_call.1} parent=11 // pred_check_branch
          %534 = sbr.rel (%p532) target = $region56
        $region55: #{tpu_custom_call.1} parent=11 // pred_region
          _
        $region56: #{tpu_custom_call.1} parent=11 // pred_fallthru
          _
        // Predicated region
        $region57: #{tpu_custom_call.1} parent=11 // pred_check
          %p535 = pneg %p325
        $region58: #{tpu_custom_call.1} parent=11 // pred_check_branch
          %537 = sbr.rel (%p535) target = $region60
        $region59: #{tpu_custom_call.1} parent=11 // pred_region
          _
        $region60: #{tpu_custom_call.1} parent=11 // pred_fallthru
          _
        // Predicated region
        $region61: #{tpu_custom_call.1} parent=11 // pred_check
          %p538 = pneg %p346
        $region62: #{tpu_custom_call.1} parent=11 // pred_check_branch
          %540 = sbr.rel (%p538) target = $region64
        $region63: #{tpu_custom_call.1} parent=11 // pred_region
          _
        $region64: #{tpu_custom_call.1} parent=11 // pred_fallthru
          _
        // Predicated region
        $region65: #{tpu_custom_call.1} parent=11 // pred_check
          %p541 = pneg %p367
        $region66: #{tpu_custom_call.1} parent=11 // pred_check_branch
          %543 = sbr.rel (%p541) target = $region68
        $region67: #{tpu_custom_call.1} parent=11 // pred_region
          _
        $region68: #{tpu_custom_call.1} parent=11 // pred_fallthru
          _
        // Predicated region
        $region69: #{tpu_custom_call.1} parent=11 // pred_check
          %p544 = pneg %p388
        $region70: #{tpu_custom_call.1} parent=11 // pred_check_branch
          %546 = sbr.rel (%p544) target = $region72
        $region71: #{tpu_custom_call.1} parent=11 // pred_region
          _
        $region72: #{tpu_custom_call.1} parent=11 // pred_fallthru
          _
        // Predicated region
        $region73: #{tpu_custom_call.1} parent=11 // pred_check
          %p547 = pneg %p409
        $region74: #{tpu_custom_call.1} parent=11 // pred_check_branch
          %549 = sbr.rel (%p547) target = $region76
        $region75: #{tpu_custom_call.1} parent=11 // pred_region
          _
        $region76: #{tpu_custom_call.1} parent=11 // pred_fallthru
          _
      $region12: #{tpu_custom_call.1} parent=5 // pred_fallthru
        _
      %p550 = scmp.lt.s32.totalorder %s35, 2
      // Predicated region
      $region77: #{tpu_custom_call.1} parent=5 // pred_check
        %p551 = pneg %p550
      $region78: #{tpu_custom_call.1} parent=5 // pred_check_branch
        %553 = sbr.rel (%p551) target = $region80
      $region79: #{tpu_custom_call.1} parent=5 // pred_region
        // Predicated region
        $region81: #{tpu_custom_call.1} parent=79 // pred_check
          %p554 = pneg %p67
        $region82: #{tpu_custom_call.1} parent=79 // pred_check_branch
          %556 = sbr.rel (%p554) target = $region84
        $region83: #{tpu_custom_call.1} parent=79 // pred_region
          %s557 = sand.u32 %s57, 1
          %s558 = scalar_lea.sflag [#allocation7], %s557
          %s559 = sand.u32 %s57, 1
          %s560 = smul.addr %s559, 8
          %s561 = scalar_lea.vmem [#allocation6], %s560
          %563 = vsyncadd %s558, 0
          %s564 = smul.addr %s42, 8
          %s565 = scalar_lea.hbm %s0, %s564
          %s567 = sshll.u32 %s565, 4
          %s568 = int_to_ptr.hbm [resolvable:$true] %s567
          %s569 = sshll.u32 %s561, 4
          %s570 = int_to_ptr.vmem [resolvable:$true] %s569
          %572 = dma.hbm_to_vmem [thread:$0]  %s568, 128, %s570, %s558
        $region84: #{tpu_custom_call.1} parent=79 // pred_fallthru
          _
      $region80: #{tpu_custom_call.1} parent=5 // pred_fallthru
        _
      %p573 = scmp.le.s32.totalorder 1, %s35
      %p574 = scmp.lt.s32.totalorder %s35, 3
      %p575 = pnand %p573, %p574
      %p576 = pneg %p575
      // Predicated region
      $region85: #{tpu_custom_call.1} parent=5 // pred_check
        _
      $region86: #{tpu_custom_call.1} parent=5 // pred_check_branch
        %578 = sbr.rel (%p575) target = $region88
      $region87: #{tpu_custom_call.1} parent=5 // pred_region
        %s579 = ssub.s32 %s35, 1
        %s580 = sand.u32 %s60, 1
        %s581 = scalar_lea.sflag [#allocation7], %s580
        %s582 = sand.u32 %s60, 1
        %s583 = smul.addr %s582, 8
        %s584 = scalar_lea.vmem [#allocation6], %s583
        // Predicated region
        $region89: #{tpu_custom_call.1} parent=87 // pred_check
          %p585 = pneg %p73
        $region90: #{tpu_custom_call.1} parent=87 // pred_check_branch
          %587 = sbr.rel (%p585) target = $region92
        $region91: #{tpu_custom_call.1} parent=87 // pred_region
          %589 = dma.done %s581, 128
        $region92: #{tpu_custom_call.1} parent=87 // pred_fallthru
          _
        // Predicated region
        $region93: #{tpu_custom_call.1} parent=87 // pred_check
          %p590 = pneg %p220
        $region94: #{tpu_custom_call.1} parent=87 // pred_check_branch
          %592 = sbr.rel (%p590) target = $region96
        $region95: #{tpu_custom_call.1} parent=87 // pred_region
          %594 = dma.done [#allocation10], 512
        $region96: #{tpu_custom_call.1} parent=87 // pred_fallthru
          _
        // Predicated region
        $region97: #{tpu_custom_call.1} parent=87 // pred_check
          %p595 = pneg %p262
        $region98: #{tpu_custom_call.1} parent=87 // pred_check_branch
          %597 = sbr.rel (%p595) target = $region100
        $region99: #{tpu_custom_call.1} parent=87 // pred_region
          %599 = dma.done [#allocation10], 512
        $region100: #{tpu_custom_call.1} parent=87 // pred_fallthru
          _
        %s600 = sand.u32 %s60, 1
        %s601 = scalar_lea.sflag [#allocation7], %s600
        %s602 = sand.u32 %s60, 1
        %s603 = smul.addr %s602, 8
        %s604 = scalar_lea.vmem [#allocation6], %s603
        %p605 = pneg %p73
        %p606 = pneg %p70
        %p607 = pneg %p94
        %p608 = pneg %p91
        %p609 = pneg %p115
        %p610 = pneg %p112
        %p611 = pneg %p136
        %p612 = pneg %p133
        %p613 = pneg %p157
        %p614 = pneg %p154
        %p615 = pneg %p178
        %p616 = pneg %p175
        %p617 = pneg %p199
        %p618 = pneg %p196
        %p619 = pneg %p220
        %p620 = pneg %p217
        %p621 = pneg %p241
        %p622 = pneg %p238
        %p623 = pneg %p262
        %p624 = pneg %p259
        %p625 = pneg %p283
        %p626 = pneg %p280
        %p627 = pneg %p304
        %p628 = pneg %p301
        %p629 = pneg %p325
        %p630 = pneg %p322
        %p631 = pneg %p346
        %p632 = pneg %p343
        %p633 = pneg %p367
        %p634 = pneg %p364
        %p635 = pneg %p388
        %p636 = pneg %p385
        %p637 = pneg %p409
        %p638 = pneg %p406
        %p639 = pneg %p437
        %p640 = pneg %p434
        %s641 = sand.u32 %s424, 1
        %s642 = scalar_lea.sflag [#allocation8], %s641
        %s643 = sand.u32 %s424, 1
        %s644 = smul.addr %s643, 8
        %s645 = scalar_lea.vmem [#allocation12], %s644
        %p646 = pneg %p465
        %p647 = pneg %p462
        %s648 = sand.u32 %s452, 1
        %s649 = scalar_lea.sflag [#allocation14], %s648
        %s650 = sand.u32 %s452, 1
        %s651 = smul.addr %s650, 8
        %s652 = scalar_lea.vmem [#allocation13], %s651
        %p653 = scmp.eq.s32.totalorder %s45, 0
        // Predicated region
        $region101: #{tpu_custom_call.1} parent=87 // pred_check
          %p654 = pneg %p653
        $region102: #{tpu_custom_call.1} parent=87 // pred_check_branch
          %656 = sbr.rel (%p654) target = $region104
        $region103: #{tpu_custom_call.1} parent=87 // pred_region
          %v657 = vld [vmem:[%s584] sm:$0xff]
          %v658 = vld [vmem:[%s3] sm:$0xff]
          %v659 = vld [vmem:[%s3 + $0x8] sm:$0xff]
          %v660 = vld [vmem:[%s3 + $0x10] sm:$0xff]
          %v661 = vld [vmem:[%s3 + $0x18] sm:$0xff]
          %v662 = vld [vmem:[%s4] sm:$0x1]
          %v664 = vperm.slane %v662, 0
          %vm666 = vcmask 261120
          %v668 = vsel %vm666, %v657, 0
          %670 = vmatpush.msra.mxu0 0.0
          %671 = vmatpush.msra.mxu0 0.0
          %672 = vmatpush.msra.mxu0 0.0
          %673 = vmatpush.msra.mxu0 0.0
          %674 = vmatpush.msra.mxu0 0.0
          %675 = vmatpush.msra.mxu0 0.0
          %676 = vmatpush.msra.mxu0 0.0
          %677 = vmatpush.msra.mxu0 0.0
          %678 = vmatpush.msra.mxu0 0.0
          %679 = vmatpush.msra.mxu0 0.0
          %680 = vmatpush.msra.mxu0 0.0
          %681 = vmatpush.msra.mxu0 0.0
          %682 = vmatpush.msra.mxu0 %v661
          %683 = vmatpush.msra.mxu0 %v660
          %684 = vmatpush.msra.mxu0 %v659
          %685 = vmatpush.msra.mxu0 %v658
          %686 = vmatmul.f32.gmra.mxu0 %v668
          %v687 = vpop.f32.mrf.mxu0
          %v688 = vadd.f32 %v664, %v687
          %689 = vdwg.mxu0
          %v690 = vld [vmem:[%s5] sm:$0xff]
          %v691 = vld [vmem:[%s5 + $0x8] sm:$0xff]
          %v692 = vld [vmem:[%s5 + $0x10] sm:$0xff]
          %v693 = vld [vmem:[%s5 + $0x18] sm:$0xff]
          %v694 = vld [vmem:[%s6] sm:$0x1]
          %v696 = vperm.slane %v694, 0
          %698 = vmatpush.msra.mxu0 0.0
          %699 = vmatpush.msra.mxu0 0.0
          %700 = vmatpush.msra.mxu0 0.0
          %701 = vmatpush.msra.mxu0 0.0
          %702 = vmatpush.msra.mxu0 0.0
          %703 = vmatpush.msra.mxu0 0.0
          %704 = vmatpush.msra.mxu0 0.0
          %705 = vmatpush.msra.mxu0 0.0
          %706 = vmatpush.msra.mxu0 0.0
          %707 = vmatpush.msra.mxu0 0.0
          %708 = vmatpush.msra.mxu0 0.0
          %709 = vmatpush.msra.mxu0 0.0
          %710 = vmatpush.msra.mxu0 %v693
          %711 = vmatpush.msra.mxu0 %v692
          %712 = vmatpush.msra.mxu0 %v691
          %713 = vmatpush.msra.mxu0 %v690
          %714 = vmatmul.f32.gmra.mxu0 %v668
          %v715 = vpop.f32.mrf.mxu0
          %v716 = vadd.f32 %v696, %v715
          %717 = vdwg.mxu0
          %vm718 = vcmask 64512
          %719 = vst.msk [vmem:[#allocation2] sm:$0xff] %vm718, %v688
          %720 = vst.msk [vmem:[#allocation3] sm:$0xff] %vm718, %v716
          %722 = vrot.lane.b32.xlu0 %v688, 120
          %v723 = vpop.permute.xlu0 %722
          %s725 = scalar_lea.vmem [#allocation2], 8
          %726 = vst.msk [vmem:[%s725] sm:$0xff] %vm718, %v723
          %728 = vrot.lane.b32.xlu0 %v716, 120
          %v729 = vpop.permute.xlu0 %728
          %s731 = scalar_lea.vmem [#allocation3], 8
          %732 = vst.msk [vmem:[%s731] sm:$0xff] %vm718, %v729
          %733 = vrot.lane.b32.xlu0 %v688, 112
          %v734 = vpop.permute.xlu0 %733
          %s736 = scalar_lea.vmem [#allocation2], 16
          %737 = vst.msk [vmem:[%s736] sm:$0xff] %vm718, %v734
          %738 = vrot.lane.b32.xlu0 %v716, 112
          %v739 = vpop.permute.xlu0 %738
          %s741 = scalar_lea.vmem [#allocation3], 16
          %742 = vst.msk [vmem:[%s741] sm:$0xff] %vm718, %v739
          %743 = vrot.lane.b32.xlu0 %v688, 104
          %v744 = vpop.permute.xlu0 %743
          %s746 = scalar_lea.vmem [#allocation2], 24
          %747 = vst.msk [vmem:[%s746] sm:$0xff] %vm718, %v744
          %748 = vrot.lane.b32.xlu0 %v716, 104
          %v749 = vpop.permute.xlu0 %748
          %s751 = scalar_lea.vmem [#allocation3], 24
          %752 = vst.msk [vmem:[%s751] sm:$0xff] %vm718, %v749
        $region104: #{tpu_custom_call.1} parent=87 // pred_fallthru
          _
        %s753 = smul.u32 %s45, 8
        %s754 = scalar_lea.vmem %s584, %s753 [#allocation6]
        %v755 = vld [vmem:[%s754] sm:$0xff]
        %v756 = vld [vmem:[%s1] sm:$0xff]
        %v757 = vld [vmem:[%s1 + $0x8] sm:$0xff]
        %v758 = vld [vmem:[%s1 + $0x10] sm:$0xff]
        %v759 = vld [vmem:[%s1 + $0x18] sm:$0xff]
        %v760 = vld [vmem:[%s2] sm:$0x1]
        %v762 = vperm.slane %v760, 0
        %vm764 = vcmask 261120
        %v766 = vsel %vm764, %v755, 0
        %768 = vmatpush.msra.mxu0 0.0
        %769 = vmatpush.msra.mxu0 0.0
        %770 = vmatpush.msra.mxu0 0.0
        %771 = vmatpush.msra.mxu0 0.0
        %772 = vmatpush.msra.mxu0 0.0
        %773 = vmatpush.msra.mxu0 0.0
        %774 = vmatpush.msra.mxu0 0.0
        %775 = vmatpush.msra.mxu0 0.0
        %776 = vmatpush.msra.mxu0 0.0
        %777 = vmatpush.msra.mxu0 0.0
        %778 = vmatpush.msra.mxu0 0.0
        %779 = vmatpush.msra.mxu0 0.0
        %780 = vmatpush.msra.mxu0 %v759
        %781 = vmatpush.msra.mxu0 %v758
        %782 = vmatpush.msra.mxu0 %v757
        %783 = vmatpush.msra.mxu0 %v756
        %784 = vmatmul.f32.gmra.mxu0 %v766
        %v785 = vpop.f32.mrf.mxu0
        %v786 = vadd.f32 %v762, %v785
        %787 = vdwg.mxu0
        %vm788 = vcmask 64512
        %789 = vst.msk [vmem:[#allocation5] sm:$0xff] %vm788, 0.0
        %v790 = vld [vmem:[#allocation2] sm:$0xff]
        %v791 = vld [vmem:[#allocation3] sm:$0xff]
        %v793 = vsel %vm788, %v786, 0
        %v796 = vsel %vm788, %v790, 0
        %798 = vmatpush.xpose.msra.mxu0 0.0
        %799 = vmatpush.xpose.msra.mxu0 0.0
        %800 = vmatpush.xpose.msra.mxu0 0.0
        %801 = vmatpush.xpose.msra.mxu0 0.0
        %802 = vmatpush.xpose.msra.mxu0 0.0
        %803 = vmatpush.xpose.msra.mxu0 0.0
        %804 = vmatpush.xpose.msra.mxu0 0.0
        %805 = vmatpush.xpose.msra.mxu0 0.0
        %806 = vmatpush.xpose.msra.mxu0 0.0
        %807 = vmatpush.xpose.msra.mxu0 0.0
        %808 = vmatpush.xpose.msra.mxu0 0.0
        %809 = vmatpush.xpose.msra.mxu0 0.0
        %810 = vmatpush.xpose.msra.mxu0 0.0
        %811 = vmatpush.xpose.msra.mxu0 0.0
        %812 = vmatpush.xpose.msra.mxu0 0.0
        %813 = vmatpush.xpose.msra.mxu0 %v796
        %814 = vmatmul.f32.gmra.mxu0 %v793
        %v815 = vpop.f32.mrf.mxu0
        %v816 = vadd.f32 0.0, %v815
        %817 = vdwg.mxu0
        %v818 = vsel %vm788, %v816, -inf
        %819 = vmax.xlane.f32.xlu0 %v818
        %v820 = vpop.xlane.xlu0 %819
        %v821 = vsub.f32 %v816, %v820
        %v822 = vmul.f32 %v821, 1.442695
        %v823 = vpow.pop %v822
        %v824 = vsel %vm788, %v823, 0.0
        %825 = vadd.xlane.f32.xlu0 %v824
        %v826 = vpop.xlane.xlu0 %825
        %v827 = vrcp.pop %v826
        %v828 = vmul.f32 %v826, %v827
        %v829 = vsub.f32 2.0, %v828
        %v830 = vmul.f32 %v827, %v829
        %v831 = vmul.f32 %v823, %v830
        %v832 = vld [vmem:[#allocation5] sm:$0xff]
        %v833 = vadd.f32 %v832, %v831
        %834 = vst.msk [vmem:[#allocation5] sm:$0xff] %vm788, %v833
        %v836 = vsel %vm788, %v831, 0
        %838 = vmatpush.msra.mxu0 0.0
        %839 = vmatpush.msra.mxu0 0.0
        %840 = vmatpush.msra.mxu0 0.0
        %841 = vmatpush.msra.mxu0 0.0
        %842 = vmatpush.msra.mxu0 0.0
        %843 = vmatpush.msra.mxu0 0.0
        %844 = vmatpush.msra.mxu0 0.0
        %845 = vmatpush.msra.mxu0 0.0
        %846 = vmatpush.msra.mxu0 0.0
        %847 = vmatpush.msra.mxu0 0.0
        %848 = vmatpush.msra.mxu0 0.0
        %849 = vmatpush.msra.mxu0 0.0
        %850 = vmatpush.msra.mxu0 0.0
        %851 = vmatpush.msra.mxu0 0.0
        %852 = vmatpush.msra.mxu0 0.0
        %853 = vmatpush.msra.mxu0 %v791
        %854 = vmatmul.f32.gmra.mxu0 %v836
        %v855 = vpop.f32.mrf.mxu0
        %v856 = vadd.f32 0.0, %v855
        %857 = vdwg.mxu0
        %858 = vst.msk [vmem:[#allocation4] sm:$0xff] %vm788, %v856
        %s859 = scalar_lea.vmem [#allocation2], 8
        %v860 = vld [vmem:[%s859] sm:$0xff]
        %s861 = scalar_lea.vmem [#allocation3], 8
        %v862 = vld [vmem:[%s861] sm:$0xff]
        %863 = vrot.lane.b32.xlu0 %v786, 120
        %v864 = vpop.permute.xlu0 %863
        %v865 = vsel %vm788, %v864, 0
        %v868 = vsel %vm788, %v860, 0
        %870 = vmatpush.xpose.msra.mxu0 0.0
        %871 = vmatpush.xpose.msra.mxu0 0.0
        %872 = vmatpush.xpose.msra.mxu0 0.0
        %873 = vmatpush.xpose.msra.mxu0 0.0
        %874 = vmatpush.xpose.msra.mxu0 0.0
        %875 = vmatpush.xpose.msra.mxu0 0.0
        %876 = vmatpush.xpose.msra.mxu0 0.0
        %877 = vmatpush.xpose.msra.mxu0 0.0
        %878 = vmatpush.xpose.msra.mxu0 0.0
        %879 = vmatpush.xpose.msra.mxu0 0.0
        %880 = vmatpush.xpose.msra.mxu0 0.0
        %881 = vmatpush.xpose.msra.mxu0 0.0
        %882 = vmatpush.xpose.msra.mxu0 0.0
        %883 = vmatpush.xpose.msra.mxu0 0.0
        %884 = vmatpush.xpose.msra.mxu0 0.0
        %885 = vmatpush.xpose.msra.mxu0 %v868
        %886 = vmatmul.f32.gmra.mxu0 %v865
        %v887 = vpop.f32.mrf.mxu0
        %v888 = vadd.f32 0.0, %v887
        %889 = vdwg.mxu0
        %v890 = vsel %vm788, %v888, -inf
        %891 = vmax.xlane.f32.xlu0 %v890
        %v892 = vpop.xlane.xlu0 %891
        %v893 = vsub.f32 %v888, %v892
        %v894 = vmul.f32 %v893, 1.442695
        %v895 = vpow.pop %v894
        %v896 = vsel %vm788, %v895, 0.0
        %897 = vadd.xlane.f32.xlu0 %v896
        %v898 = vpop.xlane.xlu0 %897
        %v899 = vrcp.pop %v898
        %v900 = vmul.f32 %v898, %v899
        %v901 = vsub.f32 2.0, %v900
        %v902 = vmul.f32 %v899, %v901
        %v903 = vmul.f32 %v895, %v902
        %v904 = vld [vmem:[#allocation5] sm:$0xff]
        %v905 = vadd.f32 %v904, %v903
        %906 = vst.msk [vmem:[#allocation5] sm:$0xff] %vm788, %v905
        %v908 = vsel %vm788, %v903, 0
        %910 = vmatpush.msra.mxu0 0.0
        %911 = vmatpush.msra.mxu0 0.0
        %912 = vmatpush.msra.mxu0 0.0
        %913 = vmatpush.msra.mxu0 0.0
        %914 = vmatpush.msra.mxu0 0.0
        %915 = vmatpush.msra.mxu0 0.0
        %916 = vmatpush.msra.mxu0 0.0
        %917 = vmatpush.msra.mxu0 0.0
        %918 = vmatpush.msra.mxu0 0.0
        %919 = vmatpush.msra.mxu0 0.0
        %920 = vmatpush.msra.mxu0 0.0
        %921 = vmatpush.msra.mxu0 0.0
        %922 = vmatpush.msra.mxu0 0.0
        %923 = vmatpush.msra.mxu0 0.0
        %924 = vmatpush.msra.mxu0 0.0
        %925 = vmatpush.msra.mxu0 %v862
        %926 = vmatmul.f32.gmra.mxu0 %v908
        %v927 = vpop.f32.mrf.mxu0
        %v928 = vadd.f32 0.0, %v927
        %929 = vdwg.mxu0
        %931 = vrot.lane.b32.xlu0 %v928, 8
        %v932 = vpop.permute.xlu0 %931
        %vm934 = vcmask 130112
        %935 = vst.msk [vmem:[#allocation4] sm:$0xff] %vm934, %v932
        %s936 = scalar_lea.vmem [#allocation2], 16
        %v937 = vld [vmem:[%s936] sm:$0xff]
        %s938 = scalar_lea.vmem [#allocation3], 16
        %v939 = vld [vmem:[%s938] sm:$0xff]
        %940 = vrot.lane.b32.xlu0 %v786, 112
        %v941 = vpop.permute.xlu0 %940
        %v942 = vsel %vm788, %v941, 0
        %v945 = vsel %vm788, %v937, 0
        %947 = vmatpush.xpose.msra.mxu0 0.0
        %948 = vmatpush.xpose.msra.mxu0 0.0
        %949 = vmatpush.xpose.msra.mxu0 0.0
        %950 = vmatpush.xpose.msra.mxu0 0.0
        %951 = vmatpush.xpose.msra.mxu0 0.0
        %952 = vmatpush.xpose.msra.mxu0 0.0
        %953 = vmatpush.xpose.msra.mxu0 0.0
        %954 = vmatpush.xpose.msra.mxu0 0.0
        %955 = vmatpush.xpose.msra.mxu0 0.0
        %956 = vmatpush.xpose.msra.mxu0 0.0
        %957 = vmatpush.xpose.msra.mxu0 0.0
        %958 = vmatpush.xpose.msra.mxu0 0.0
        %959 = vmatpush.xpose.msra.mxu0 0.0
        %960 = vmatpush.xpose.msra.mxu0 0.0
        %961 = vmatpush.xpose.msra.mxu0 0.0
        %962 = vmatpush.xpose.msra.mxu0 %v945
        %963 = vmatmul.f32.gmra.mxu0 %v942
        %v964 = vpop.f32.mrf.mxu0
        %v965 = vadd.f32 0.0, %v964
        %966 = vdwg.mxu0
        %v967 = vsel %vm788, %v965, -inf
        %968 = vmax.xlane.f32.xlu0 %v967
        %v969 = vpop.xlane.xlu0 %968
        %v970 = vsub.f32 %v965, %v969
        %v971 = vmul.f32 %v970, 1.442695
        %v972 = vpow.pop %v971
        %v973 = vsel %vm788, %v972, 0.0
        %974 = vadd.xlane.f32.xlu0 %v973
        %v975 = vpop.xlane.xlu0 %974
        %v976 = vrcp.pop %v975
        %v977 = vmul.f32 %v975, %v976
        %v978 = vsub.f32 2.0, %v977
        %v979 = vmul.f32 %v976, %v978
        %v980 = vmul.f32 %v972, %v979
        %v981 = vld [vmem:[#allocation5] sm:$0xff]
        %v982 = vadd.f32 %v981, %v980
        %983 = vst.msk [vmem:[#allocation5] sm:$0xff] %vm788, %v982
        %v985 = vsel %vm788, %v980, 0
        %987 = vmatpush.msra.mxu0 0.0
        %988 = vmatpush.msra.mxu0 0.0
        %989 = vmatpush.msra.mxu0 0.0
        %990 = vmatpush.msra.mxu0 0.0
        %991 = vmatpush.msra.mxu0 0.0
        %992 = vmatpush.msra.mxu0 0.0
        %993 = vmatpush.msra.mxu0 0.0
        %994 = vmatpush.msra.mxu0 0.0
        %995 = vmatpush.msra.mxu0 0.0
        %996 = vmatpush.msra.mxu0 0.0
        %997 = vmatpush.msra.mxu0 0.0
        %998 = vmatpush.msra.mxu0 0.0
        %999 = vmatpush.msra.mxu0 0.0
        %1000 = vmatpush.msra.mxu0 0.0
        %1001 = vmatpush.msra.mxu0 0.0
        %1002 = vmatpush.msra.mxu0 %v939
        %1003 = vmatmul.f32.gmra.mxu0 %v985
        %v1004 = vpop.f32.mrf.mxu0
        %v1005 = vadd.f32 0.0, %v1004
        %1006 = vdwg.mxu0
        %1008 = vrot.lane.b32.xlu0 %v1005, 16
        %v1009 = vpop.permute.xlu0 %1008
        %vm1011 = vcmask 195712
        %1012 = vst.msk [vmem:[#allocation4] sm:$0xff] %vm1011, %v1009
        %s1013 = scalar_lea.vmem [#allocation2], 24
        %v1014 = vld [vmem:[%s1013] sm:$0xff]
        %s1015 = scalar_lea.vmem [#allocation3], 24
        %v1016 = vld [vmem:[%s1015] sm:$0xff]
        %1017 = vrot.lane.b32.xlu0 %v786, 104
        %v1018 = vpop.permute.xlu0 %1017
        %v1019 = vsel %vm788, %v1018, 0
        %v1022 = vsel %vm788, %v1014, 0
        %1024 = vmatpush.xpose.msra.mxu0 0.0
        %1025 = vmatpush.xpose.msra.mxu0 0.0
        %1026 = vmatpush.xpose.msra.mxu0 0.0
        %1027 = vmatpush.xpose.msra.mxu0 0.0
        %1028 = vmatpush.xpose.msra.mxu0 0.0
        %1029 = vmatpush.xpose.msra.mxu0 0.0
        %1030 = vmatpush.xpose.msra.mxu0 0.0
        %1031 = vmatpush.xpose.msra.mxu0 0.0
        %1032 = vmatpush.xpose.msra.mxu0 0.0
        %1033 = vmatpush.xpose.msra.mxu0 0.0
        %1034 = vmatpush.xpose.msra.mxu0 0.0
        %1035 = vmatpush.xpose.msra.mxu0 0.0
        %1036 = vmatpush.xpose.msra.mxu0 0.0
        %1037 = vmatpush.xpose.msra.mxu0 0.0
        %1038 = vmatpush.xpose.msra.mxu0 0.0
        %1039 = vmatpush.xpose.msra.mxu0 %v1022
        %1040 = vmatmul.f32.gmra.mxu0 %v1019
        %v1041 = vpop.f32.mrf.mxu0
        %v1042 = vadd.f32 0.0, %v1041
        %1043 = vdwg.mxu0
        %v1044 = vsel %vm788, %v1042, -inf
        %1045 = vmax.xlane.f32.xlu0 %v1044
        %v1046 = vpop.xlane.xlu0 %1045
        %v1047 = vsub.f32 %v1042, %v1046
        %v1048 = vmul.f32 %v1047, 1.442695
        %v1049 = vpow.pop %v1048
        %v1050 = vsel %vm788, %v1049, 0.0
        %1051 = vadd.xlane.f32.xlu0 %v1050
        %v1052 = vpop.xlane.xlu0 %1051
        %v1053 = vrcp.pop %v1052
        %v1054 = vmul.f32 %v1052, %v1053
        %v1055 = vsub.f32 2.0, %v1054
        %v1056 = vmul.f32 %v1053, %v1055
        %v1057 = vmul.f32 %v1049, %v1056
        %v1058 = vld [vmem:[#allocation5] sm:$0xff]
        %v1059 = vadd.f32 %v1058, %v1057
        %1060 = vst.msk [vmem:[#allocation5] sm:$0xff] %vm788, %v1059
        %v1062 = vsel %vm788, %v1057, 0
        %1064 = vmatpush.msra.mxu0 0.0
        %1065 = vmatpush.msra.mxu0 0.0
        %1066 = vmatpush.msra.mxu0 0.0
        %1067 = vmatpush.msra.mxu0 0.0
        %1068 = vmatpush.msra.mxu0 0.0
        %1069 = vmatpush.msra.mxu0 0.0
        %1070 = vmatpush.msra.mxu0 0.0
        %1071 = vmatpush.msra.mxu0 0.0
        %1072 = vmatpush.msra.mxu0 0.0
        %1073 = vmatpush.msra.mxu0 0.0
        %1074 = vmatpush.msra.mxu0 0.0
        %1075 = vmatpush.msra.mxu0 0.0
        %1076 = vmatpush.msra.mxu0 0.0
        %1077 = vmatpush.msra.mxu0 0.0
        %1078 = vmatpush.msra.mxu0 0.0
        %1079 = vmatpush.msra.mxu0 %v1016
        %1080 = vmatmul.f32.gmra.mxu0 %v1062
        %v1081 = vpop.f32.mrf.mxu0
        %v1082 = vadd.f32 0.0, %v1081
        %1083 = vdwg.mxu0
        %1085 = vrot.lane.b32.xlu0 %v1082, 24
        %v1086 = vpop.permute.xlu0 %1085
        %vm1088 = vcmask 261312
        %1089 = vst.msk [vmem:[#allocation4] sm:$0xff] %vm1088, %v1086
        %v1090 = vld [vmem:[#allocation4] sm:$0xff]
        %v1091 = vld [vmem:[#allocation9] sm:$0xff]
        %v1092 = vld [vmem:[#allocation9 + $0x8] sm:$0xff]
        %v1093 = vld [vmem:[#allocation9 + $0x10] sm:$0xff]
        %v1094 = vld [vmem:[#allocation9 + $0x18] sm:$0xff]
        %v1095 = vld [vmem:[%s8] sm:$0x1]
        %v1097 = vperm.slane %v1095, 0
        %v1100 = vsel %vm764, %v1090, 0
        %1102 = vmatpush.msra.mxu0 0.0
        %1103 = vmatpush.msra.mxu0 0.0
        %1104 = vmatpush.msra.mxu0 0.0
        %1105 = vmatpush.msra.mxu0 0.0
        %1106 = vmatpush.msra.mxu0 0.0
        %1107 = vmatpush.msra.mxu0 0.0
        %1108 = vmatpush.msra.mxu0 0.0
        %1109 = vmatpush.msra.mxu0 0.0
        %1110 = vmatpush.msra.mxu0 0.0
        %1111 = vmatpush.msra.mxu0 0.0
        %1112 = vmatpush.msra.mxu0 0.0
        %1113 = vmatpush.msra.mxu0 0.0
        %1114 = vmatpush.msra.mxu0 %v1094
        %1115 = vmatpush.msra.mxu0 %v1093
        %1116 = vmatpush.msra.mxu0 %v1092
        %1117 = vmatpush.msra.mxu0 %v1091
        %1118 = vmatmul.f32.gmra.mxu0 %v1100
        %v1119 = vpop.f32.mrf.mxu0
        %v1120 = vadd.f32 %v1097, %v1119
        %1121 = vdwg.mxu0
        %v1122 = vadd.f32 %v755, %v1120
        %v1123 = vld [vmem:[%s13] sm:$0x1]
        %v1124 = vld [vmem:[%s14] sm:$0x1]
        %v1125 = vsel %vm764, %v1122, 0.0
        %1126 = vadd.xlane.f32.xlu0 %v1125
        %v1127 = vpop.xlane.xlu0 %1126
        %v1128 = vrcp.pop 32.0
        %v1129 = vmul.f32 32.0, %v1128
        %v1130 = vsub.f32 1.0, %v1129
        %v1131 = vmul.f32 %v1128, %v1130
        %v1132 = vadd.f32 %v1128, %v1131
        %vm1133 = vweird.f32 %v1128
        %v1134 = vsel %vm1133, %v1128, %v1132
        %v1135 = vmul.f32 %v1127, %v1134
        %v1136 = vsub.f32 %v1122, %v1135
        %v1137 = vmul.f32 %v1136, %v1136
        %v1138 = vsel %vm764, %v1137, 0.0
        %1139 = vadd.xlane.f32.xlu0 %v1138
        %v1140 = vpop.xlane.xlu0 %1139
        %v1141 = vmul.f32 %v1140, %v1134
        %v1142 = vadd.f32 %v1141, 1e-06
        %v1143 = vrsqrt.pop %v1142
        %v1144 = vmul.f32 %v1143, %v1142
        %v1145 = vmul.f32 %v1144, %v1143
        %v1146 = vmul.f32 0.5, %v1145
        %v1147 = vsub.f32 1.5, %v1146
        %v1148 = vmul.f32 %v1143, %v1147
        %vm1149 = vweird.f32 %v1142
        %vm1150 = vweird.f32 %v1143
        %vm1151 = vmor %vm1149, %vm1150
        %v1152 = vsel %vm1151, %v1143, %v1148
        %v1153 = vmul.f32 %v1136, %v1152
        %v1155 = vperm.slane %v1123, 0
        %v1157 = vmul.f32 %v1153, %v1155
        %v1159 = vperm.slane %v1124, 0
        %v1161 = vadd.f32 %v1157, %v1159
        %v1162 = vld [vmem:[#allocation11] sm:$0xff]
        %v1163 = vld [vmem:[#allocation11 + $0x8] sm:$0xff]
        %v1164 = vld [vmem:[#allocation11 + $0x10] sm:$0xff]
        %v1165 = vld [vmem:[#allocation11 + $0x18] sm:$0xff]
        %v1166 = vld [vmem:[%s10] sm:$0x1]
        %v1168 = vperm.slane %v1166, 0
        %v1171 = vsel %vm764, %v1161, 0
        %1173 = vmatpush.msra.mxu0 0.0
        %1174 = vmatpush.msra.mxu0 0.0
        %1175 = vmatpush.msra.mxu0 0.0
        %1176 = vmatpush.msra.mxu0 0.0
        %1177 = vmatpush.msra.mxu0 0.0
        %1178 = vmatpush.msra.mxu0 0.0
        %1179 = vmatpush.msra.mxu0 0.0
        %1180 = vmatpush.msra.mxu0 0.0
        %1181 = vmatpush.msra.mxu0 0.0
        %1182 = vmatpush.msra.mxu0 0.0
        %1183 = vmatpush.msra.mxu0 0.0
        %1184 = vmatpush.msra.mxu0 0.0
        %1185 = vmatpush.msra.mxu0 %v1165
        %1186 = vmatpush.msra.mxu0 %v1164
        %1187 = vmatpush.msra.mxu0 %v1163
        %1188 = vmatpush.msra.mxu0 %v1162
        %1189 = vmatmul.f32.gmra.mxu0 %v1171
        %v1190 = vpop.f32.mrf.mxu0
        %v1191 = vadd.f32 %v1168, %v1190
        %1192 = vdwg.mxu0
        %v1193 = vmax.f32 %v1191, 0.0
        %v1194 = vld [vmem:[%s11] sm:$0xff]
        %v1195 = vld [vmem:[%s11 + $0x8] sm:$0xff]
        %v1196 = vld [vmem:[%s11 + $0x10] sm:$0xff]
        %v1197 = vld [vmem:[%s11 + $0x18] sm:$0xff]
        %v1198 = vld [vmem:[%s11 + $0x20] sm:$0xff]
        %v1199 = vld [vmem:[%s11 + $0x28] sm:$0xff]
        %v1200 = vld [vmem:[%s11 + $0x30] sm:$0xff]
        %v1201 = vld [vmem:[%s11 + $0x38] sm:$0xff]
        %v1202 = vld [vmem:[%s12] sm:$0x1]
        %v1204 = vperm.slane %v1202, 0
        %vm1206 = vcmask 523264
        %v1208 = vsel %vm1206, %v1193, 0
        %1210 = vmatpush.msra.mxu0 0.0
        %1211 = vmatpush.msra.mxu0 0.0
        %1212 = vmatpush.msra.mxu0 0.0
        %1213 = vmatpush.msra.mxu0 0.0
        %1214 = vmatpush.msra.mxu0 0.0
        %1215 = vmatpush.msra.mxu0 0.0
        %1216 = vmatpush.msra.mxu0 0.0
        %1217 = vmatpush.msra.mxu0 0.0
        %1218 = vmatpush.msra.mxu0 %v1201
        %1219 = vmatpush.msra.mxu0 %v1200
        %1220 = vmatpush.msra.mxu0 %v1199
        %1221 = vmatpush.msra.mxu0 %v1198
        %1222 = vmatpush.msra.mxu0 %v1197
        %1223 = vmatpush.msra.mxu0 %v1196
        %1224 = vmatpush.msra.mxu0 %v1195
        %1225 = vmatpush.msra.mxu0 %v1194
        %1226 = vmatmul.f32.gmra.mxu0 %v1208
        %v1227 = vpop.f32.mrf.mxu0
        %v1228 = vadd.f32 %v1204, %v1227
        %1229 = vdwg.mxu0
        %v1230 = vadd.f32 %v1161, %v1228
        %v1231 = vld [vmem:[%s15] sm:$0x1]
        %v1232 = vld [vmem:[%s16] sm:$0x1]
        %v1233 = vsel %vm764, %v1230, 0.0
        %1234 = vadd.xlane.f32.xlu0 %v1233
        %v1235 = vpop.xlane.xlu0 %1234
        %v1236 = vmul.f32 %v1235, %v1134
        %v1237 = vsub.f32 %v1230, %v1236
        %v1238 = vmul.f32 %v1237, %v1237
        %v1239 = vsel %vm764, %v1238, 0.0
        %1240 = vadd.xlane.f32.xlu0 %v1239
        %v1241 = vpop.xlane.xlu0 %1240
        %v1242 = vmul.f32 %v1241, %v1134
        %v1243 = vadd.f32 %v1242, 1e-06
        %v1244 = vrsqrt.pop %v1243
        %v1245 = vmul.f32 %v1244, %v1243
        %v1246 = vmul.f32 %v1245, %v1244
        %v1247 = vmul.f32 0.5, %v1246
        %v1248 = vsub.f32 1.5, %v1247
        %v1249 = vmul.f32 %v1244, %v1248
        %vm1250 = vweird.f32 %v1243
        %vm1251 = vweird.f32 %v1244
        %vm1252 = vmor %vm1250, %vm1251
        %v1253 = vsel %vm1252, %v1244, %v1249
        %v1254 = vmul.f32 %v1237, %v1253
        %v1256 = vperm.slane %v1231, 0
        %v1258 = vmul.f32 %v1254, %v1256
        %v1260 = vperm.slane %v1232, 0
        %v1262 = vadd.f32 %v1258, %v1260
        %1263 = vst.msk [vmem:[%s645] sm:$0xff] %vm764, %v1262
        %v1264 = vld [vmem:[#allocation5] sm:$0xff]
        %v1265 = vmul.f32 %v1264, 0.25
        %1266 = vst.msk [vmem:[%s652] sm:$0xff] %vm788, %v1265
        %s1267 = sand.u32 %s424, 1
        %s1268 = scalar_lea.sflag [#allocation8], %s1267
        %s1269 = sand.u32 %s424, 1
        %s1270 = smul.addr %s1269, 8
        %s1271 = scalar_lea.vmem [#allocation12], %s1270
        %s1272 = sand.u32 %s452, 1
        %s1273 = scalar_lea.sflag [#allocation14], %s1272
        %s1274 = sand.u32 %s452, 1
        %s1275 = smul.addr %s1274, 8
        %s1276 = scalar_lea.vmem [#allocation13], %s1275
        // Predicated region
        $region105: #{tpu_custom_call.1} parent=87 // pred_check
          %p1277 = pneg %p434
        $region106: #{tpu_custom_call.1} parent=87 // pred_check_branch
          %1279 = sbr.rel (%p1277) target = $region108
        $region107: #{tpu_custom_call.1} parent=87 // pred_region
          %1281 = vsyncadd %s1268, 0
          %s1282 = sadd.s32 %s45, %s44
          %s1283 = smul.addr %s1282, 8
          %s1284 = scalar_lea.hbm %s17, %s1283
          %s1286 = sshll.u32 %s1271, 4
          %s1287 = int_to_ptr.vmem [resolvable:$true] %s1286
          %s1288 = sshll.u32 %s1284, 4
          %s1289 = int_to_ptr.hbm [resolvable:$true] %s1288
          %1291 = dma.vmem_to_hbm [thread:$0]  %s1287, 128, %s1289, %s1268
        $region108: #{tpu_custom_call.1} parent=87 // pred_fallthru
          _
        // Predicated region
        $region109: #{tpu_custom_call.1} parent=87 // pred_check
          %p1292 = pneg %p462
        $region110: #{tpu_custom_call.1} parent=87 // pred_check_branch
          %1294 = sbr.rel (%p1292) target = $region112
        $region111: #{tpu_custom_call.1} parent=87 // pred_region
          %1296 = vsyncadd %s1273, 0
          %s1297 = sadd.s32 %s45, %s44
          %s1298 = smul.addr %s1297, 8
          %s1299 = scalar_lea.hbm %s18, %s1298
          %s1301 = sshll.u32 %s1276, 4
          %s1302 = int_to_ptr.vmem [resolvable:$true] %s1301
          %s1303 = sshll.u32 %s1299, 4
          %s1304 = int_to_ptr.hbm [resolvable:$true] %s1303
          %1306 = dma.vmem_to_hbm [thread:$0]  %s1302, 128, %s1304, %s1273
        $region112: #{tpu_custom_call.1} parent=87 // pred_fallthru
          _
      $region88: #{tpu_custom_call.1} parent=5 // pred_fallthru
        _
      %p1307 = scmp.le.s32.totalorder 2, %s35
      // Predicated region
      $region113: #{tpu_custom_call.1} parent=5 // pred_check
        %p1308 = pneg %p1307
      $region114: #{tpu_custom_call.1} parent=5 // pred_check_branch
        %1310 = sbr.rel (%p1308) target = $region116
      $region115: #{tpu_custom_call.1} parent=5 // pred_region
        %s1311 = ssub.s32 %s35, 2
        // Predicated region
        $region117: #{tpu_custom_call.1} parent=115 // pred_check
          %p1312 = pneg %p440
        $region118: #{tpu_custom_call.1} parent=115 // pred_check_branch
          %1314 = sbr.rel (%p1312) target = $region120
        $region119: #{tpu_custom_call.1} parent=115 // pred_region
          %s1315 = sand.u32 %s425, 1
          %s1316 = scalar_lea.sflag [#allocation8], %s1315
          %s1317 = sand.u32 %s425, 1
          %s1318 = smul.addr %s1317, 8
          %s1319 = scalar_lea.vmem [#allocation12], %s1318
          %1321 = dma.done %s1316, 128
        $region120: #{tpu_custom_call.1} parent=115 // pred_fallthru
          _
        // Predicated region
        $region121: #{tpu_custom_call.1} parent=115 // pred_check
          %p1322 = pneg %p468
        $region122: #{tpu_custom_call.1} parent=115 // pred_check_branch
          %1324 = sbr.rel (%p1322) target = $region124
        $region123: #{tpu_custom_call.1} parent=115 // pred_region
          %s1325 = sand.u32 %s453, 1
          %s1326 = scalar_lea.sflag [#allocation14], %s1325
          %s1327 = sand.u32 %s453, 1
          %s1328 = smul.addr %s1327, 8
          %s1329 = scalar_lea.vmem [#allocation13], %s1328
          %1331 = dma.done %s1326, 128
        $region124: #{tpu_custom_call.1} parent=115 // pred_fallthru
          _
      $region116: #{tpu_custom_call.1} parent=5 // pred_fallthru
        _
    $region6: #{tpu_custom_call.1} parent=1 // loop_footer
      %s39 = sadd.s32 1, %s35
    $region7: #{tpu_custom_call.1} parent=1 // loop_footer_branch
      %34 = sbr.rel target = $region3
    $region8: #{tpu_custom_call.1} parent=1 // loop_exit
      _
    %1332 = vsyncpa [#allocation7], 1
    %s1333 = scalar_lea.sflag [#allocation7], 1
    %1334 = vsyncpa %s1333, 1
    %1335 = vsyncpa [#allocation10], 1
    %1336 = vsyncpa [#allocation8], 1
    %s1337 = scalar_lea.sflag [#allocation8], 1
    %1338 = vsyncpa %s1337, 1
    %1339 = vsyncpa [#allocation14], 1
    %s1340 = scalar_lea.sflag [#allocation14], 1
    %1341 = vsyncpa %s1340, 1

</llo_original>
